<compile_context>
chip_gen: v7x
topology: tpu7x:2x2x1
jax: 0.10.0
libtpu: 0.0.40
codegen_flags: <defaults>
</compile_context>

<pallas_src>
import math

import numpy as np
import jax
import jax.numpy as jnp
from jax.experimental import pallas as pl
from jax.experimental.pallas import tpu as pltpu

# ---- small, module-consistent config -----------------------------------------
INPUT_SIZE = 16        # input_size
D_MODEL = 32           # "dim_feedforward" in the torch module == encoder d_model
NHEAD = 4
HEAD_DIM = D_MODEL // NHEAD
NUM_LAYERS = 2
FF_DIM = 2 * D_MODEL   # inner FFN width (dim_feedforward * 2)
NUM_CLASSES = 1
B = 2                  # batch
S = 8                  # sequence length
BS = B * S             # folded rows
NHBS = NHEAD * BS      # stacked-head rows
LN_EPS = 1e-5          # torch LayerNorm default
LANES = 128            # slab lane width


# ---- positional encoding (same formula as the torch PositionalEncoding) ------
def positional_encoding(seq_len, d_model):
    position = jnp.arange(seq_len, dtype=jnp.float32)[:, None]
    div_term = jnp.exp(
        jnp.arange(0, d_model, 2, dtype=jnp.float32) * (-math.log(10000.0) / d_model)
    )
    pe = jnp.zeros((seq_len, d_model), dtype=jnp.float32)
    pe = pe.at[:, 0::2].set(jnp.sin(position * div_term))
    pe = pe.at[:, 1::2].set(jnp.cos(position * div_term))
    return pe


# ---- single-slab parameter layout (static, module-level) ----------------------
def _param_layout():
    # matrices first (all row counts are multiples of 8 -> no alignment waste)
    mats = [("wemb", (INPUT_SIZE, D_MODEL)),        # embedding weight, transposed
            ("peb", (BS, D_MODEL)),                 # tiled pos-enc + embedding bias
            ("amask", (NHBS, NHBS))]                # additive head/batch block mask
    for l in range(NUM_LAYERS):
        mats += [
            (f"wqkv{l}", (D_MODEL, 3 * D_MODEL)),
            (f"wo{l}",   (D_MODEL, D_MODEL)),
            (f"w1{l}",   (D_MODEL, FF_DIM)),
            (f"w2{l}",   (FF_DIM, D_MODEL)),
        ]
    # all (1, D) row-vectors packed densely (one vector per sublane row)
    vecs = []
    for l in range(NUM_LAYERS):
        vecs += [
            (f"bqkv{l}", (1, 3 * D_MODEL)),
            (f"bo{l}",   (1, D_MODEL)),
            (f"ln1g{l}", (1, D_MODEL)),
            (f"ln1b{l}", (1, D_MODEL)),
            (f"b1{l}",   (1, FF_DIM)),
            (f"b2{l}",   (1, D_MODEL)),
            (f"ln2g{l}", (1, D_MODEL)),
            (f"ln2b{l}", (1, D_MODEL)),
        ]
    vecs += [("wfc", (1, D_MODEL)), ("bfc", (1, NUM_CLASSES))]

    offsets, row = {}, 0
    for name, (r, c) in mats:
        offsets[name] = (row, r, c)
        row += ((r + 7) // 8) * 8
    for name, (r, c) in vecs:      # dense sublane packing
        offsets[name] = (row, r, c)
        row += 1
    rows = ((row + 7) // 8) * 8
    return mats + vecs, offsets, rows


_ENTRIES, _OFFSETS, _SLAB_ROWS = _param_layout()


def pack_params(arrays):
    """Pack all parameters into one (rows, 128) f32 slab -> a single DMA."""
    slab = jnp.zeros((_SLAB_ROWS, LANES), dtype=jnp.float32)
    for name, (r, c) in _ENTRIES:
        off = _OFFSETS[name][0]
        slab = slab.at[off:off + r, :c].set(
            jnp.asarray(arrays[name], dtype=jnp.float32).reshape(r, c))
    return slab


# ---- Pallas kernel -------------------------------------------------------------
def _layer_norm(x, gamma, beta):
    mu = jnp.mean(x, axis=-1, keepdims=True)
    var = jnp.mean((x - mu) ** 2, axis=-1, keepdims=True)
    return (x - mu) * jax.lax.rsqrt(var + LN_EPS) * gamma + beta


def transformer_kernel(x_ref, slab_ref, out_ref):
    def param(name):
        off, r, c = _OFFSETS[name]
        return slab_ref[off:off + r, :c]          # static slice -> simple load

    x = x_ref[...]                                 # (B*S, INPUT_SIZE), batch folded

    # embedding + (pos-enc + embedding-bias), pre-fused in the wrapper
    h = jnp.dot(x, param("wemb"), preferred_element_type=jnp.float32) + param("peb")

    # additive mask: 0 where (head, batch) blocks match, -1e30 elsewhere (baked
    # into the slab at pack time -> no iota / compare / select in the kernel)
    mask_add = param("amask")                      # (NHBS, NHBS)

    for l in range(NUM_LAYERS):
        # ---- multi-head self attention (post-norm encoder layer) ----
        # NOTE: the 1/sqrt(HEAD_DIM) scale is already folded into the q columns.
        qkv = (jnp.dot(h, param(f"wqkv{l}"), preferred_element_type=jnp.float32)
               + param(f"bqkv{l}"))
        q = qkv[:, 0 * D_MODEL:1 * D_MODEL]
        k = qkv[:, 1 * D_MODEL:2 * D_MODEL]
        v = qkv[:, 2 * D_MODEL:3 * D_MODEL]

        # stack heads along the row (sublane) axis: (NHEAD*B*S, HEAD_DIM)
        def stack_heads(t):
            return jnp.concatenate(
                [t[:, hh * HEAD_DIM:(hh + 1) * HEAD_DIM] for hh in range(NHEAD)],
                axis=0)

        q_s = stack_heads(q)
        k_s = stack_heads(k)
        v_s = stack_heads(v)

        # ONE score matmul + ONE softmax + ONE PV matmul for all heads/batches
        s = jnp.einsum('qd,kd->qk', q_s, k_s,
                       preferred_element_type=jnp.float32)        # (NHBS, NHBS)
        s = s + mask_add
        s = s - jnp.max(s, axis=-1, keepdims=True)
        p = jnp.exp(s)
        p = p * pl.reciprocal(jnp.sum(p, axis=-1, keepdims=True), approx=True)
        ctx = jnp.dot(p, v_s, preferred_element_type=jnp.float32)  # (NHBS, HEAD_DIM)

        # fuse head-concat into Wo: accumulate per-head slices (no lane concat)
        off_wo, _, _ = _OFFSETS[f"wo{l}"]
        attn = jnp.dot(ctx[0:BS, :],
                       slab_ref[off_wo:off_wo + HEAD_DIM, :D_MODEL],
                       preferred_element_type=jnp.float32)
        for hh in range(1, NHEAD):
            attn = attn + jnp.dot(
                ctx[hh * BS:(hh + 1) * BS, :],
                slab_ref[off_wo + hh * HEAD_DIM: off_wo + (hh + 1) * HEAD_DIM, :D_MODEL],
                preferred_element_type=jnp.float32)
        attn = attn + param(f"bo{l}")
        h = _layer_norm(h + attn, param(f"ln1g{l}"), param(f"ln1b{l}"))

        # ---- feed-forward (ReLU) ----
        ff = (jnp.dot(h, param(f"w1{l}"), preferred_element_type=jnp.float32)
              + param(f"b1{l}"))
        ff = jnp.maximum(ff, 0.0)
        ff = (jnp.dot(ff, param(f"w2{l}"), preferred_element_type=jnp.float32)
              + param(f"b2{l}"))
        h = _layer_norm(h + ff, param(f"ln2g{l}"), param(f"ln2b{l}"))

    # mean-pool over each sequence (static row slices, B is tiny)
    pooled = jnp.concatenate(
        [jnp.mean(h[b * S:(b + 1) * S, :], axis=0, keepdims=True) for b in range(B)],
        axis=0)                                    # (B, D_MODEL)

    # classifier head as a lane-wise multiply + reduce (NUM_CLASSES == 1)
    out = jnp.sum(pooled * param("wfc"), axis=-1, keepdims=True) + param("bfc")
    out_ref[...] = out                             # (B, NUM_CLASSES)


# ---- one-time parameter packing (hoisted out of the forward) -------------------
def build_slab(p):
    pe = positional_encoding(S, D_MODEL)
    peb = jnp.tile(pe, (B, 1)) + p['bemb'][None, :]        # fused pos-enc + emb bias

    # additive mask, block-diagonal over (head, batch):  row//S == col//S
    idx = np.arange(NHBS)
    same = (idx[:, None] // S) == (idx[None, :] // S)
    amask = np.where(same, 0.0, -1e30).astype(np.float32)

    # fold 1/sqrt(HEAD_DIM) into the q columns of wqkv / bqkv
    scale = 1.0 / math.sqrt(HEAD_DIM)
    qcol_scale = jnp.concatenate(
        [jnp.full((D_MODEL,), scale, jnp.float32),
         jnp.ones((2 * D_MODEL,), jnp.float32)])

    arrays = {"wemb": p['wemb'].T, "peb": peb, "amask": amask,
              "wfc": p['wfc'], "bfc": p['bfc'][None, :]}
    for l in range(NUM_LAYERS):
        arrays[f"wqkv{l}"] = p['wqkv'][l].T * qcol_scale[None, :]
        arrays[f"bqkv{l}"] = (p['bqkv'][l] * qcol_scale)[None, :]
        arrays[f"wo{l}"] = p['wo'][l].T
        arrays[f"bo{l}"] = p['bo'][l][None, :]
        arrays[f"ln1g{l}"] = p['ln1g'][l][None, :]
        arrays[f"ln1b{l}"] = p['ln1b'][l][None, :]
        arrays[f"w1{l}"] = p['w1'][l].T
        arrays[f"b1{l}"] = p['b1'][l][None, :]
        arrays[f"w2{l}"] = p['w2'][l].T
        arrays[f"b2{l}"] = p['b2'][l][None, :]
        arrays[f"ln2g{l}"] = p['ln2g'][l][None, :]
        arrays[f"ln2b{l}"] = p['ln2b'][l][None, :]
    return pack_params(arrays)


# ---- jit-able forward: just a reshape + one pallas_call -------------------------
def transformer_forward(x, slab):
    x_folded = x.reshape(BS, INPUT_SIZE)                   # fold batch into rows

    flops = (2 * BS * INPUT_SIZE * D_MODEL
             + NUM_LAYERS * (2 * BS * D_MODEL * 3 * D_MODEL      # qkv
                             + 2 * NHBS * NHBS * HEAD_DIM        # scores
                             + 2 * NHBS * NHBS * HEAD_DIM        # pv
                             + 2 * BS * D_MODEL * D_MODEL        # wo
                             + 2 * 2 * BS * D_MODEL * FF_DIM)    # ffn
             + 2 * B * D_MODEL * NUM_CLASSES)
    cost = pl.CostEstimate(
        flops=flops,
        transcendentals=NUM_LAYERS * NHBS * NHBS,
        bytes_accessed=4 * (BS * INPUT_SIZE + _SLAB_ROWS * LANES + B * NUM_CLASSES))

    out = pl.pallas_call(
        transformer_kernel,
        out_shape=jax.ShapeDtypeStruct((B, NUM_CLASSES), jnp.float32),
        grid=(1,),                                   # single invocation; no serial grid
        in_specs=[pl.BlockSpec((BS, INPUT_SIZE), lambda i: (0, 0)),
                  pl.BlockSpec((_SLAB_ROWS, LANES), lambda i: (0, 0))],
        out_specs=pl.BlockSpec((B, NUM_CLASSES), lambda i: (0, 0)),
        compiler_params=pltpu.CompilerParams(dimension_semantics=("arbitrary",)),
        cost_estimate=cost,
    )(x_folded, slab)
    return out.squeeze()   # matches torch's .squeeze()


# ---- deterministic parameter init ----------------------------------------------
def init_params(key):
    ks = jax.random.split(key, 16)

    def nrm(k, shape, scale=0.1):
        return scale * jax.random.normal(k, shape, dtype=jnp.float32)

    return dict(
        wemb=nrm(ks[0], (D_MODEL, INPUT_SIZE)),
        bemb=nrm(ks[1], (D_MODEL,)),
        wqkv=nrm(ks[2], (NUM_LAYERS, 3 * D_MODEL, D_MODEL)),
        bqkv=nrm(ks[3], (NUM_LAYERS, 3 * D_MODEL)),
        wo=nrm(ks[4], (NUM_LAYERS, D_MODEL, D_MODEL)),
        bo=nrm(ks[5], (NUM_LAYERS, D_MODEL)),
        ln1g=1.0 + nrm(ks[6], (NUM_LAYERS, D_MODEL)),
        ln1b=nrm(ks[7], (NUM_LAYERS, D_MODEL)),
        w1=nrm(ks[8], (NUM_LAYERS, FF_DIM, D_MODEL)),
        b1=nrm(ks[9], (NUM_LAYERS, FF_DIM)),
        w2=nrm(ks[10], (NUM_LAYERS, D_MODEL, FF_DIM)),
        b2=nrm(ks[11], (NUM_LAYERS, D_MODEL)),
        ln2g=1.0 + nrm(ks[12], (NUM_LAYERS, D_MODEL)),
        ln2b=nrm(ks[13], (NUM_LAYERS, D_MODEL)),
        wfc=nrm(ks[14], (NUM_CLASSES, D_MODEL)),
        bfc=nrm(ks[15], (NUM_CLASSES,)),
    )


# ---- pure-JAX reference (mirrors the PyTorch forward in eval mode) --------------
def forward_ref(x, p):
    hp = jax.lax.Precision.HIGHEST
    dot = lambda a, b: jnp.dot(a, b, precision=hp)
    pe = positional_encoding(S, D_MODEL)

    def layer_norm(v, g, bta):
        mu = v.mean(-1, keepdims=True)
        var = ((v - mu) ** 2).mean(-1, keepdims=True)
        return (v - mu) / jnp.sqrt(var + LN_EPS) * g + bta

    h = dot(x, p['wemb'].T) + p['bemb']
    h = h + pe[None]
    for l in range(NUM_LAYERS):
        qkv = dot(h, p['wqkv'][l].T) + p['bqkv'][l]
        q, k, v = jnp.split(qkv, 3, axis=-1)
        sh = lambda t: t.reshape(B, S, NHEAD, HEAD_DIM).transpose(0, 2, 1, 3)
        qh, kh, vh = sh(q), sh(k), sh(v)
        s = jnp.einsum('bhqd,bhkd->bhqk', qh, kh, precision=hp) / math.sqrt(HEAD_DIM)
        pr = jax.nn.softmax(s, axis=-1)
        a = jnp.einsum('bhqk,bhkd->bhqd', pr, vh, precision=hp)
        a = a.transpose(0, 2, 1, 3).reshape(B, S, D_MODEL)
        a = dot(a, p['wo'][l].T) + p['bo'][l]
        h = layer_norm(h + a, p['ln1g'][l], p['ln1b'][l])
        ff = jax.nn.relu(dot(h, p['w1'][l].T) + p['b1'][l])
        ff = dot(ff, p['w2'][l].T) + p['b2'][l]
        h = layer_norm(h + ff, p['ln2g'][l], p['ln2b'][l])
    pooled = h.mean(axis=1)
    return (dot(pooled, p['wfc'].T) + p['bfc']).squeeze()


if __name__ == "__main__":
    key = jax.random.PRNGKey(0)
    pkey, xkey = jax.random.split(key)
    params = init_params(pkey)
    x = jax.random.normal(xkey, (B, S, INPUT_SIZE), dtype=jnp.float32)

    slab = build_slab(params)                 # one-time packing (hoisted)
    fwd = jax.jit(transformer_forward)        # per-call path: reshape + pallas_call

    out = fwd(x, slab)
    out = jax.block_until_ready(out)

    ref = forward_ref(x, params)
    assert out.shape == (B,), out.shape
    np.testing.assert_allclose(np.asarray(out), np.asarray(ref), rtol=1e-2, atol=1e-2)
    print("KERNEL_OK")
</pallas_src>

<mosaic_0001>
module attributes {stable_mosaic.version = 11 : i64} {
  func.func @transformer_kernel(%arg0: i32, %arg1: memref<16x16xf32, #tpu.memory_space<vmem>>, %arg2: memref<440x128xf32, #tpu.memory_space<vmem>>, %arg3: memref<2x1xf32, #tpu.memory_space<vmem>>) attributes {dimension_semantics = [#tpu.dimension_semantics<arbitrary>], iteration_bounds = array<i64: 1>, scalar_prefetch = 0 : i64, scratch_operands = 0 : i64, tpu.core_type = #tpu.core_type<tc>, window_params = [{pipeline_mode = #tpu.pipeline_mode<synchronous>, transform_indices = @transform_0, window_bounds = array<i64: 16, 16>}, {pipeline_mode = #tpu.pipeline_mode<synchronous>, transform_indices = @transform_1, window_bounds = array<i64: 440, 128>}, {pipeline_mode = #tpu.pipeline_mode<synchronous>, transform_indices = @transform_2, window_bounds = array<i64: 2, 1>}]} {
    %c0 = arith.constant 0 : index
    %c0_0 = arith.constant 0 : index
    %0 = vector.load %arg1[%c0, %c0_0] : memref<16x16xf32, #tpu.memory_space<vmem>>, vector<16x16xf32>
    %c0_1 = arith.constant 0 : index
    %c0_2 = arith.constant 0 : index
    %1 = vector.load %arg2[%c0_1, %c0_2] : memref<440x128xf32, #tpu.memory_space<vmem>>, vector<16x32xf32>
    %cst = arith.constant dense<0.000000e+00> : vector<16x32xf32>
    %2 = tpu.matmul %0, %1, %cst {dimension_numbers = #tpu.dot_dimension_numbers<[1], [0], [0], [1], [0, 0, 1, 1], [], []>} : vector<16x16xf32>, vector<16x32xf32>, vector<16x32xf32> -> vector<16x32xf32>
    %c16 = arith.constant 16 : index
    %c0_3 = arith.constant 0 : index
    %3 = vector.load %arg2[%c16, %c0_3] : memref<440x128xf32, #tpu.memory_space<vmem>>, vector<16x32xf32>
    %4 = arith.addf %2, %3 : vector<16x32xf32>
    %c32 = arith.constant 32 : index
    %c0_4 = arith.constant 0 : index
    %5 = vector.load %arg2[%c32, %c0_4] : memref<440x128xf32, #tpu.memory_space<vmem>>, vector<64x64xf32>
    %c96 = arith.constant 96 : index
    %c0_5 = arith.constant 0 : index
    %6 = vector.load %arg2[%c96, %c0_5] : memref<440x128xf32, #tpu.memory_space<vmem>>, vector<32x96xf32>
    %cst_6 = arith.constant dense<0.000000e+00> : vector<16x96xf32>
    %7 = tpu.matmul %4, %6, %cst_6 {dimension_numbers = #tpu.dot_dimension_numbers<[1], [0], [0], [1], [0, 0, 1, 1], [], []>} : vector<16x32xf32>, vector<32x96xf32>, vector<16x96xf32> -> vector<16x96xf32>
    %c416 = arith.constant 416 : index
    %c0_7 = arith.constant 0 : index
    %8 = vector.load %arg2[%c416, %c0_7] : memref<440x128xf32, #tpu.memory_space<vmem>>, vector<1x96xf32>
    %9 = vector.broadcast %8 : vector<1x96xf32> to vector<16x96xf32>
    %10 = arith.addf %7, %9 : vector<16x96xf32>
    %11 = vector.extract_strided_slice %10 {offsets = [0, 0], sizes = [16, 32], strides = [1, 1]} : vector<16x96xf32> to vector<16x32xf32>
    %12 = vector.extract_strided_slice %10 {offsets = [0, 32], sizes = [16, 32], strides = [1, 1]} : vector<16x96xf32> to vector<16x32xf32>
    %13 = vector.extract_strided_slice %10 {offsets = [0, 64], sizes = [16, 32], strides = [1, 1]} : vector<16x96xf32> to vector<16x32xf32>
    %14 = vector.extract_strided_slice %11 {offsets = [0, 0], sizes = [16, 8], strides = [1, 1]} : vector<16x32xf32> to vector<16x8xf32>
    %15 = vector.extract_strided_slice %11 {offsets = [0, 8], sizes = [16, 8], strides = [1, 1]} : vector<16x32xf32> to vector<16x8xf32>
    %16 = vector.extract_strided_slice %11 {offsets = [0, 16], sizes = [16, 8], strides = [1, 1]} : vector<16x32xf32> to vector<16x8xf32>
    %17 = vector.extract_strided_slice %11 {offsets = [0, 24], sizes = [16, 8], strides = [1, 1]} : vector<16x32xf32> to vector<16x8xf32>
    %18 = tpu.concatenate %14, %15, %16, %17 in 0 : vector<16x8xf32>, vector<16x8xf32>, vector<16x8xf32>, vector<16x8xf32> -> vector<64x8xf32>
    %19 = vector.extract_strided_slice %12 {offsets = [0, 0], sizes = [16, 8], strides = [1, 1]} : vector<16x32xf32> to vector<16x8xf32>
    %20 = vector.extract_strided_slice %12 {offsets = [0, 8], sizes = [16, 8], strides = [1, 1]} : vector<16x32xf32> to vector<16x8xf32>
    %21 = vector.extract_strided_slice %12 {offsets = [0, 16], sizes = [16, 8], strides = [1, 1]} : vector<16x32xf32> to vector<16x8xf32>
    %22 = vector.extract_strided_slice %12 {offsets = [0, 24], sizes = [16, 8], strides = [1, 1]} : vector<16x32xf32> to vector<16x8xf32>
    %23 = tpu.concatenate %19, %20, %21, %22 in 0 : vector<16x8xf32>, vector<16x8xf32>, vector<16x8xf32>, vector<16x8xf32> -> vector<64x8xf32>
    %24 = vector.extract_strided_slice %13 {offsets = [0, 0], sizes = [16, 8], strides = [1, 1]} : vector<16x32xf32> to vector<16x8xf32>
    %25 = vector.extract_strided_slice %13 {offsets = [0, 8], sizes = [16, 8], strides = [1, 1]} : vector<16x32xf32> to vector<16x8xf32>
    %26 = vector.extract_strided_slice %13 {offsets = [0, 16], sizes = [16, 8], strides = [1, 1]} : vector<16x32xf32> to vector<16x8xf32>
    %27 = vector.extract_strided_slice %13 {offsets = [0, 24], sizes = [16, 8], strides = [1, 1]} : vector<16x32xf32> to vector<16x8xf32>
    %28 = tpu.concatenate %24, %25, %26, %27 in 0 : vector<16x8xf32>, vector<16x8xf32>, vector<16x8xf32>, vector<16x8xf32> -> vector<64x8xf32>
    "tpu.trace_start"() <{level = 10 : i32, message = "qd,kd->qk"}> : () -> ()
    %cst_8 = arith.constant dense<0.000000e+00> : vector<64x64xf32>
    %29 = tpu.matmul %18, %23, %cst_8 {dimension_numbers = #tpu.dot_dimension_numbers<[1], [1], [0], [0], [0, 0, 1, 0], [], []>} : vector<64x8xf32>, vector<64x8xf32>, vector<64x64xf32> -> vector<64x64xf32>
    "tpu.trace_stop"() : () -> ()
    %30 = arith.addf %29, %5 : vector<64x64xf32>
    %cst_9 = arith.constant dense<0xFF800000> : vector<64xf32>
    %31 = vector.multi_reduction <maximumf>, %30, %cst_9 [1] : vector<64x64xf32> to vector<64xf32>
    %32 = vector.shape_cast %31 : vector<64xf32> to vector<64x1xf32>
    %33 = vector.broadcast %32 : vector<64x1xf32> to vector<64x64xf32>
    %34 = arith.subf %30, %33 : vector<64x64xf32>
    %35 = math.exp %34 : vector<64x64xf32>
    %cst_10 = arith.constant dense<0.000000e+00> : vector<64xf32>
    %36 = vector.multi_reduction <add>, %35, %cst_10 [1] : vector<64x64xf32> to vector<64xf32>
    %37 = vector.shape_cast %36 : vector<64xf32> to vector<64x1xf32>
    %38 = tpu.reciprocal %37 {approx = true} : vector<64x1xf32> -> vector<64x1xf32>
    %39 = vector.broadcast %38 : vector<64x1xf32> to vector<64x64xf32>
    %40 = arith.mulf %35, %39 : vector<64x64xf32>
    %cst_11 = arith.constant dense<0.000000e+00> : vector<64x8xf32>
    %41 = tpu.matmul %40, %28, %cst_11 {dimension_numbers = #tpu.dot_dimension_numbers<[1], [0], [0], [1], [0, 0, 1, 1], [], []>} : vector<64x64xf32>, vector<64x8xf32>, vector<64x8xf32> -> vector<64x8xf32>
    %42 = vector.extract_strided_slice %41 {offsets = [0, 0], sizes = [16, 8], strides = [1, 1]} : vector<64x8xf32> to vector<16x8xf32>
    %c128 = arith.constant 128 : index
    %c0_12 = arith.constant 0 : index
    %43 = vector.load %arg2[%c128, %c0_12] : memref<440x128xf32, #tpu.memory_space<vmem>>, vector<8x32xf32>
    %cst_13 = arith.constant dense<0.000000e+00> : vector<16x32xf32>
    %44 = tpu.matmul %42, %43, %cst_13 {dimension_numbers = #tpu.dot_dimension_numbers<[1], [0], [0], [1], [0, 0, 1, 1], [], []>} : vector<16x8xf32>, vector<8x32xf32>, vector<16x32xf32> -> vector<16x32xf32>
    %45 = vector.extract_strided_slice %41 {offsets = [16, 0], sizes = [16, 8], strides = [1, 1]} : vector<64x8xf32> to vector<16x8xf32>
    %c136 = arith.constant 136 : index
    %c0_14 = arith.constant 0 : index
    %46 = vector.load %arg2[%c136, %c0_14] : memref<440x128xf32, #tpu.memory_space<vmem>>, vector<8x32xf32>
    %cst_15 = arith.constant dense<0.000000e+00> : vector<16x32xf32>
    %47 = tpu.matmul %45, %46, %cst_15 {dimension_numbers = #tpu.dot_dimension_numbers<[1], [0], [0], [1], [0, 0, 1, 1], [], []>} : vector<16x8xf32>, vector<8x32xf32>, vector<16x32xf32> -> vector<16x32xf32>
    %48 = arith.addf %44, %47 : vector<16x32xf32>
    %49 = vector.extract_strided_slice %41 {offsets = [32, 0], sizes = [16, 8], strides = [1, 1]} : vector<64x8xf32> to vector<16x8xf32>
    %c144 = arith.constant 144 : index
    %c0_16 = arith.constant 0 : index
    %50 = vector.load %arg2[%c144, %c0_16] : memref<440x128xf32, #tpu.memory_space<vmem>>, vector<8x32xf32>
    %cst_17 = arith.constant dense<0.000000e+00> : vector<16x32xf32>
    %51 = tpu.matmul %49, %50, %cst_17 {dimension_numbers = #tpu.dot_dimension_numbers<[1], [0], [0], [1], [0, 0, 1, 1], [], []>} : vector<16x8xf32>, vector<8x32xf32>, vector<16x32xf32> -> vector<16x32xf32>
    %52 = arith.addf %48, %51 : vector<16x32xf32>
    %53 = vector.extract_strided_slice %41 {offsets = [48, 0], sizes = [16, 8], strides = [1, 1]} : vector<64x8xf32> to vector<16x8xf32>
    %c152 = arith.constant 152 : index
    %c0_18 = arith.constant 0 : index
    %54 = vector.load %arg2[%c152, %c0_18] : memref<440x128xf32, #tpu.memory_space<vmem>>, vector<8x32xf32>
    %cst_19 = arith.constant dense<0.000000e+00> : vector<16x32xf32>
    %55 = tpu.matmul %53, %54, %cst_19 {dimension_numbers = #tpu.dot_dimension_numbers<[1], [0], [0], [1], [0, 0, 1, 1], [], []>} : vector<16x8xf32>, vector<8x32xf32>, vector<16x32xf32> -> vector<16x32xf32>
    %56 = arith.addf %52, %55 : vector<16x32xf32>
    %c417 = arith.constant 417 : index
    %c0_20 = arith.constant 0 : index
    %57 = vector.load %arg2[%c417, %c0_20] : memref<440x128xf32, #tpu.memory_space<vmem>>, vector<1x32xf32>
    %58 = vector.broadcast %57 : vector<1x32xf32> to vector<16x32xf32>
    %59 = arith.addf %56, %58 : vector<16x32xf32>
    %60 = arith.addf %4, %59 : vector<16x32xf32>
    %c418 = arith.constant 418 : index
    %c0_21 = arith.constant 0 : index
    %61 = vector.load %arg2[%c418, %c0_21] : memref<440x128xf32, #tpu.memory_space<vmem>>, vector<1x32xf32>
    %c419 = arith.constant 419 : index
    %c0_22 = arith.constant 0 : index
    %62 = vector.load %arg2[%c419, %c0_22] : memref<440x128xf32, #tpu.memory_space<vmem>>, vector<1x32xf32>
    %cst_23 = arith.constant dense<0.000000e+00> : vector<16xf32>
    %63 = vector.multi_reduction <add>, %60, %cst_23 [1] : vector<16x32xf32> to vector<16xf32>
    %64 = vector.shape_cast %63 : vector<16xf32> to vector<16x1xf32>
    %cst_24 = arith.constant 3.200000e+01 : f32
    %65 = vector.broadcast %cst_24 : f32 to vector<16x1xf32>
    %66 = arith.divf %64, %65 : vector<16x1xf32>
    %67 = vector.broadcast %66 : vector<16x1xf32> to vector<16x32xf32>
    %68 = arith.subf %60, %67 : vector<16x32xf32>
    %69 = arith.mulf %68, %68 : vector<16x32xf32>
    %cst_25 = arith.constant dense<0.000000e+00> : vector<16xf32>
    %70 = vector.multi_reduction <add>, %69, %cst_25 [1] : vector<16x32xf32> to vector<16xf32>
    %71 = vector.shape_cast %70 : vector<16xf32> to vector<16x1xf32>
    %cst_26 = arith.constant 3.200000e+01 : f32
    %72 = vector.broadcast %cst_26 : f32 to vector<16x1xf32>
    %73 = arith.divf %71, %72 : vector<16x1xf32>
    %74 = vector.broadcast %66 : vector<16x1xf32> to vector<16x32xf32>
    %75 = arith.subf %60, %74 : vector<16x32xf32>
    %cst_27 = arith.constant 9.99999974E-6 : f32
    %76 = vector.broadcast %cst_27 : f32 to vector<16x1xf32>
    %77 = arith.addf %73, %76 : vector<16x1xf32>
    %78 = math.rsqrt %77 : vector<16x1xf32>
    %79 = vector.broadcast %78 : vector<16x1xf32> to vector<16x32xf32>
    %80 = arith.mulf %75, %79 : vector<16x32xf32>
    %81 = vector.broadcast %61 : vector<1x32xf32> to vector<16x32xf32>
    %82 = arith.mulf %80, %81 : vector<16x32xf32>
    %83 = vector.broadcast %62 : vector<1x32xf32> to vector<16x32xf32>
    %84 = arith.addf %82, %83 : vector<16x32xf32>
    %c160 = arith.constant 160 : index
    %c0_28 = arith.constant 0 : index
    %85 = vector.load %arg2[%c160, %c0_28] : memref<440x128xf32, #tpu.memory_space<vmem>>, vector<32x64xf32>
    %cst_29 = arith.constant dense<0.000000e+00> : vector<16x64xf32>
    %86 = tpu.matmul %84, %85, %cst_29 {dimension_numbers = #tpu.dot_dimension_numbers<[1], [0], [0], [1], [0, 0, 1, 1], [], []>} : vector<16x32xf32>, vector<32x64xf32>, vector<16x64xf32> -> vector<16x64xf32>
    %c420 = arith.constant 420 : index
    %c0_30 = arith.constant 0 : index
    %87 = vector.load %arg2[%c420, %c0_30] : memref<440x128xf32, #tpu.memory_space<vmem>>, vector<1x64xf32>
    %88 = vector.broadcast %87 : vector<1x64xf32> to vector<16x64xf32>
    %89 = arith.addf %86, %88 : vector<16x64xf32>
    %cst_31 = arith.constant 0.000000e+00 : f32
    %90 = vector.broadcast %cst_31 : f32 to vector<16x64xf32>
    %91 = arith.maximumf %89, %90 : vector<16x64xf32>
    %c192 = arith.constant 192 : index
    %c0_32 = arith.constant 0 : index
    %92 = vector.load %arg2[%c192, %c0_32] : memref<440x128xf32, #tpu.memory_space<vmem>>, vector<64x32xf32>
    %cst_33 = arith.constant dense<0.000000e+00> : vector<16x32xf32>
    %93 = tpu.matmul %91, %92, %cst_33 {dimension_numbers = #tpu.dot_dimension_numbers<[1], [0], [0], [1], [0, 0, 1, 1], [], []>} : vector<16x64xf32>, vector<64x32xf32>, vector<16x32xf32> -> vector<16x32xf32>
    %c421 = arith.constant 421 : index
    %c0_34 = arith.constant 0 : index
    %94 = vector.load %arg2[%c421, %c0_34] : memref<440x128xf32, #tpu.memory_space<vmem>>, vector<1x32xf32>
    %95 = vector.broadcast %94 : vector<1x32xf32> to vector<16x32xf32>
    %96 = arith.addf %93, %95 : vector<16x32xf32>
    %97 = arith.addf %84, %96 : vector<16x32xf32>
    %c422 = arith.constant 422 : index
    %c0_35 = arith.constant 0 : index
    %98 = vector.load %arg2[%c422, %c0_35] : memref<440x128xf32, #tpu.memory_space<vmem>>, vector<1x32xf32>
    %c423 = arith.constant 423 : index
    %c0_36 = arith.constant 0 : index
    %99 = vector.load %arg2[%c423, %c0_36] : memref<440x128xf32, #tpu.memory_space<vmem>>, vector<1x32xf32>
    %cst_37 = arith.constant dense<0.000000e+00> : vector<16xf32>
    %100 = vector.multi_reduction <add>, %97, %cst_37 [1] : vector<16x32xf32> to vector<16xf32>
    %101 = vector.shape_cast %100 : vector<16xf32> to vector<16x1xf32>
    %cst_38 = arith.constant 3.200000e+01 : f32
    %102 = vector.broadcast %cst_38 : f32 to vector<16x1xf32>
    %103 = arith.divf %101, %102 : vector<16x1xf32>
    %104 = vector.broadcast %103 : vector<16x1xf32> to vector<16x32xf32>
    %105 = arith.subf %97, %104 : vector<16x32xf32>
    %106 = arith.mulf %105, %105 : vector<16x32xf32>
    %cst_39 = arith.constant dense<0.000000e+00> : vector<16xf32>
    %107 = vector.multi_reduction <add>, %106, %cst_39 [1] : vector<16x32xf32> to vector<16xf32>
    %108 = vector.shape_cast %107 : vector<16xf32> to vector<16x1xf32>
    %cst_40 = arith.constant 3.200000e+01 : f32
    %109 = vector.broadcast %cst_40 : f32 to vector<16x1xf32>
    %110 = arith.divf %108, %109 : vector<16x1xf32>
    %111 = vector.broadcast %103 : vector<16x1xf32> to vector<16x32xf32>
    %112 = arith.subf %97, %111 : vector<16x32xf32>
    %cst_41 = arith.constant 9.99999974E-6 : f32
    %113 = vector.broadcast %cst_41 : f32 to vector<16x1xf32>
    %114 = arith.addf %110, %113 : vector<16x1xf32>
    %115 = math.rsqrt %114 : vector<16x1xf32>
    %116 = vector.broadcast %115 : vector<16x1xf32> to vector<16x32xf32>
    %117 = arith.mulf %112, %116 : vector<16x32xf32>
    %118 = vector.broadcast %98 : vector<1x32xf32> to vector<16x32xf32>
    %119 = arith.mulf %117, %118 : vector<16x32xf32>
    %120 = vector.broadcast %99 : vector<1x32xf32> to vector<16x32xf32>
    %121 = arith.addf %119, %120 : vector<16x32xf32>
    %c256 = arith.constant 256 : index
    %c0_42 = arith.constant 0 : index
    %122 = vector.load %arg2[%c256, %c0_42] : memref<440x128xf32, #tpu.memory_space<vmem>>, vector<32x96xf32>
    %cst_43 = arith.constant dense<0.000000e+00> : vector<16x96xf32>
    %123 = tpu.matmul %121, %122, %cst_43 {dimension_numbers = #tpu.dot_dimension_numbers<[1], [0], [0], [1], [0, 0, 1, 1], [], []>} : vector<16x32xf32>, vector<32x96xf32>, vector<16x96xf32> -> vector<16x96xf32>
    %c424 = arith.constant 424 : index
    %c0_44 = arith.constant 0 : index
    %124 = vector.load %arg2[%c424, %c0_44] : memref<440x128xf32, #tpu.memory_space<vmem>>, vector<1x96xf32>
    %125 = vector.broadcast %124 : vector<1x96xf32> to vector<16x96xf32>
    %126 = arith.addf %123, %125 : vector<16x96xf32>
    %127 = vector.extract_strided_slice %126 {offsets = [0, 0], sizes = [16, 32], strides = [1, 1]} : vector<16x96xf32> to vector<16x32xf32>
    %128 = vector.extract_strided_slice %126 {offsets = [0, 32], sizes = [16, 32], strides = [1, 1]} : vector<16x96xf32> to vector<16x32xf32>
    %129 = vector.extract_strided_slice %126 {offsets = [0, 64], sizes = [16, 32], strides = [1, 1]} : vector<16x96xf32> to vector<16x32xf32>
    %130 = vector.extract_strided_slice %127 {offsets = [0, 0], sizes = [16, 8], strides = [1, 1]} : vector<16x32xf32> to vector<16x8xf32>
    %131 = vector.extract_strided_slice %127 {offsets = [0, 8], sizes = [16, 8], strides = [1, 1]} : vector<16x32xf32> to vector<16x8xf32>
    %132 = vector.extract_strided_slice %127 {offsets = [0, 16], sizes = [16, 8], strides = [1, 1]} : vector<16x32xf32> to vector<16x8xf32>
    %133 = vector.extract_strided_slice %127 {offsets = [0, 24], sizes = [16, 8], strides = [1, 1]} : vector<16x32xf32> to vector<16x8xf32>
    %134 = tpu.concatenate %130, %131, %132, %133 in 0 : vector<16x8xf32>, vector<16x8xf32>, vector<16x8xf32>, vector<16x8xf32> -> vector<64x8xf32>
    %135 = vector.extract_strided_slice %128 {offsets = [0, 0], sizes = [16, 8], strides = [1, 1]} : vector<16x32xf32> to vector<16x8xf32>
    %136 = vector.extract_strided_slice %128 {offsets = [0, 8], sizes = [16, 8], strides = [1, 1]} : vector<16x32xf32> to vector<16x8xf32>
    %137 = vector.extract_strided_slice %128 {offsets = [0, 16], sizes = [16, 8], strides = [1, 1]} : vector<16x32xf32> to vector<16x8xf32>
    %138 = vector.extract_strided_slice %128 {offsets = [0, 24], sizes = [16, 8], strides = [1, 1]} : vector<16x32xf32> to vector<16x8xf32>
    %139 = tpu.concatenate %135, %136, %137, %138 in 0 : vector<16x8xf32>, vector<16x8xf32>, vector<16x8xf32>, vector<16x8xf32> -> vector<64x8xf32>
    %140 = vector.extract_strided_slice %129 {offsets = [0, 0], sizes = [16, 8], strides = [1, 1]} : vector<16x32xf32> to vector<16x8xf32>
    %141 = vector.extract_strided_slice %129 {offsets = [0, 8], sizes = [16, 8], strides = [1, 1]} : vector<16x32xf32> to vector<16x8xf32>
    %142 = vector.extract_strided_slice %129 {offsets = [0, 16], sizes = [16, 8], strides = [1, 1]} : vector<16x32xf32> to vector<16x8xf32>
    %143 = vector.extract_strided_slice %129 {offsets = [0, 24], sizes = [16, 8], strides = [1, 1]} : vector<16x32xf32> to vector<16x8xf32>
    %144 = tpu.concatenate %140, %141, %142, %143 in 0 : vector<16x8xf32>, vector<16x8xf32>, vector<16x8xf32>, vector<16x8xf32> -> vector<64x8xf32>
    "tpu.trace_start"() <{level = 10 : i32, message = "qd,kd->qk"}> : () -> ()
    %cst_45 = arith.constant dense<0.000000e+00> : vector<64x64xf32>
    %145 = tpu.matmul %134, %139, %cst_45 {dimension_numbers = #tpu.dot_dimension_numbers<[1], [1], [0], [0], [0, 0, 1, 0], [], []>} : vector<64x8xf32>, vector<64x8xf32>, vector<64x64xf32> -> vector<64x64xf32>
    "tpu.trace_stop"() : () -> ()
    %146 = arith.addf %145, %5 : vector<64x64xf32>
    %cst_46 = arith.constant dense<0xFF800000> : vector<64xf32>
    %147 = vector.multi_reduction <maximumf>, %146, %cst_46 [1] : vector<64x64xf32> to vector<64xf32>
    %148 = vector.shape_cast %147 : vector<64xf32> to vector<64x1xf32>
    %149 = vector.broadcast %148 : vector<64x1xf32> to vector<64x64xf32>
    %150 = arith.subf %146, %149 : vector<64x64xf32>
    %151 = math.exp %150 : vector<64x64xf32>
    %cst_47 = arith.constant dense<0.000000e+00> : vector<64xf32>
    %152 = vector.multi_reduction <add>, %151, %cst_47 [1] : vector<64x64xf32> to vector<64xf32>
    %153 = vector.shape_cast %152 : vector<64xf32> to vector<64x1xf32>
    %154 = tpu.reciprocal %153 {approx = true} : vector<64x1xf32> -> vector<64x1xf32>
    %155 = vector.broadcast %154 : vector<64x1xf32> to vector<64x64xf32>
    %156 = arith.mulf %151, %155 : vector<64x64xf32>
    %cst_48 = arith.constant dense<0.000000e+00> : vector<64x8xf32>
    %157 = tpu.matmul %156, %144, %cst_48 {dimension_numbers = #tpu.dot_dimension_numbers<[1], [0], [0], [1], [0, 0, 1, 1], [], []>} : vector<64x64xf32>, vector<64x8xf32>, vector<64x8xf32> -> vector<64x8xf32>
    %158 = vector.extract_strided_slice %157 {offsets = [0, 0], sizes = [16, 8], strides = [1, 1]} : vector<64x8xf32> to vector<16x8xf32>
    %c288 = arith.constant 288 : index
    %c0_49 = arith.constant 0 : index
    %159 = vector.load %arg2[%c288, %c0_49] : memref<440x128xf32, #tpu.memory_space<vmem>>, vector<8x32xf32>
    %cst_50 = arith.constant dense<0.000000e+00> : vector<16x32xf32>
    %160 = tpu.matmul %158, %159, %cst_50 {dimension_numbers = #tpu.dot_dimension_numbers<[1], [0], [0], [1], [0, 0, 1, 1], [], []>} : vector<16x8xf32>, vector<8x32xf32>, vector<16x32xf32> -> vector<16x32xf32>
    %161 = vector.extract_strided_slice %157 {offsets = [16, 0], sizes = [16, 8], strides = [1, 1]} : vector<64x8xf32> to vector<16x8xf32>
    %c296 = arith.constant 296 : index
    %c0_51 = arith.constant 0 : index
    %162 = vector.load %arg2[%c296, %c0_51] : memref<440x128xf32, #tpu.memory_space<vmem>>, vector<8x32xf32>
    %cst_52 = arith.constant dense<0.000000e+00> : vector<16x32xf32>
    %163 = tpu.matmul %161, %162, %cst_52 {dimension_numbers = #tpu.dot_dimension_numbers<[1], [0], [0], [1], [0, 0, 1, 1], [], []>} : vector<16x8xf32>, vector<8x32xf32>, vector<16x32xf32> -> vector<16x32xf32>
    %164 = arith.addf %160, %163 : vector<16x32xf32>
    %165 = vector.extract_strided_slice %157 {offsets = [32, 0], sizes = [16, 8], strides = [1, 1]} : vector<64x8xf32> to vector<16x8xf32>
    %c304 = arith.constant 304 : index
    %c0_53 = arith.constant 0 : index
    %166 = vector.load %arg2[%c304, %c0_53] : memref<440x128xf32, #tpu.memory_space<vmem>>, vector<8x32xf32>
    %cst_54 = arith.constant dense<0.000000e+00> : vector<16x32xf32>
    %167 = tpu.matmul %165, %166, %cst_54 {dimension_numbers = #tpu.dot_dimension_numbers<[1], [0], [0], [1], [0, 0, 1, 1], [], []>} : vector<16x8xf32>, vector<8x32xf32>, vector<16x32xf32> -> vector<16x32xf32>
    %168 = arith.addf %164, %167 : vector<16x32xf32>
    %169 = vector.extract_strided_slice %157 {offsets = [48, 0], sizes = [16, 8], strides = [1, 1]} : vector<64x8xf32> to vector<16x8xf32>
    %c312 = arith.constant 312 : index
    %c0_55 = arith.constant 0 : index
    %170 = vector.load %arg2[%c312, %c0_55] : memref<440x128xf32, #tpu.memory_space<vmem>>, vector<8x32xf32>
    %cst_56 = arith.constant dense<0.000000e+00> : vector<16x32xf32>
    %171 = tpu.matmul %169, %170, %cst_56 {dimension_numbers = #tpu.dot_dimension_numbers<[1], [0], [0], [1], [0, 0, 1, 1], [], []>} : vector<16x8xf32>, vector<8x32xf32>, vector<16x32xf32> -> vector<16x32xf32>
    %172 = arith.addf %168, %171 : vector<16x32xf32>
    %c425 = arith.constant 425 : index
    %c0_57 = arith.constant 0 : index
    %173 = vector.load %arg2[%c425, %c0_57] : memref<440x128xf32, #tpu.memory_space<vmem>>, vector<1x32xf32>
    %174 = vector.broadcast %173 : vector<1x32xf32> to vector<16x32xf32>
    %175 = arith.addf %172, %174 : vector<16x32xf32>
    %176 = arith.addf %121, %175 : vector<16x32xf32>
    %c426 = arith.constant 426 : index
    %c0_58 = arith.constant 0 : index
    %177 = vector.load %arg2[%c426, %c0_58] : memref<440x128xf32, #tpu.memory_space<vmem>>, vector<1x32xf32>
    %c427 = arith.constant 427 : index
    %c0_59 = arith.constant 0 : index
    %178 = vector.load %arg2[%c427, %c0_59] : memref<440x128xf32, #tpu.memory_space<vmem>>, vector<1x32xf32>
    %cst_60 = arith.constant dense<0.000000e+00> : vector<16xf32>
    %179 = vector.multi_reduction <add>, %176, %cst_60 [1] : vector<16x32xf32> to vector<16xf32>
    %180 = vector.shape_cast %179 : vector<16xf32> to vector<16x1xf32>
    %cst_61 = arith.constant 3.200000e+01 : f32
    %181 = vector.broadcast %cst_61 : f32 to vector<16x1xf32>
    %182 = arith.divf %180, %181 : vector<16x1xf32>
    %183 = vector.broadcast %182 : vector<16x1xf32> to vector<16x32xf32>
    %184 = arith.subf %176, %183 : vector<16x32xf32>
    %185 = arith.mulf %184, %184 : vector<16x32xf32>
    %cst_62 = arith.constant dense<0.000000e+00> : vector<16xf32>
    %186 = vector.multi_reduction <add>, %185, %cst_62 [1] : vector<16x32xf32> to vector<16xf32>
    %187 = vector.shape_cast %186 : vector<16xf32> to vector<16x1xf32>
    %cst_63 = arith.constant 3.200000e+01 : f32
    %188 = vector.broadcast %cst_63 : f32 to vector<16x1xf32>
    %189 = arith.divf %187, %188 : vector<16x1xf32>
    %190 = vector.broadcast %182 : vector<16x1xf32> to vector<16x32xf32>
    %191 = arith.subf %176, %190 : vector<16x32xf32>
    %cst_64 = arith.constant 9.99999974E-6 : f32
    %192 = vector.broadcast %cst_64 : f32 to vector<16x1xf32>
    %193 = arith.addf %189, %192 : vector<16x1xf32>
    %194 = math.rsqrt %193 : vector<16x1xf32>
    %195 = vector.broadcast %194 : vector<16x1xf32> to vector<16x32xf32>
    %196 = arith.mulf %191, %195 : vector<16x32xf32>
    %197 = vector.broadcast %177 : vector<1x32xf32> to vector<16x32xf32>
    %198 = arith.mulf %196, %197 : vector<16x32xf32>
    %199 = vector.broadcast %178 : vector<1x32xf32> to vector<16x32xf32>
    %200 = arith.addf %198, %199 : vector<16x32xf32>
    %c320 = arith.constant 320 : index
    %c0_65 = arith.constant 0 : index
    %201 = vector.load %arg2[%c320, %c0_65] : memref<440x128xf32, #tpu.memory_space<vmem>>, vector<32x64xf32>
    %cst_66 = arith.constant dense<0.000000e+00> : vector<16x64xf32>
    %202 = tpu.matmul %200, %201, %cst_66 {dimension_numbers = #tpu.dot_dimension_numbers<[1], [0], [0], [1], [0, 0, 1, 1], [], []>} : vector<16x32xf32>, vector<32x64xf32>, vector<16x64xf32> -> vector<16x64xf32>
    %c428 = arith.constant 428 : index
    %c0_67 = arith.constant 0 : index
    %203 = vector.load %arg2[%c428, %c0_67] : memref<440x128xf32, #tpu.memory_space<vmem>>, vector<1x64xf32>
    %204 = vector.broadcast %203 : vector<1x64xf32> to vector<16x64xf32>
    %205 = arith.addf %202, %204 : vector<16x64xf32>
    %cst_68 = arith.constant 0.000000e+00 : f32
    %206 = vector.broadcast %cst_68 : f32 to vector<16x64xf32>
    %207 = arith.maximumf %205, %206 : vector<16x64xf32>
    %c352 = arith.constant 352 : index
    %c0_69 = arith.constant 0 : index
    %208 = vector.load %arg2[%c352, %c0_69] : memref<440x128xf32, #tpu.memory_space<vmem>>, vector<64x32xf32>
    %cst_70 = arith.constant dense<0.000000e+00> : vector<16x32xf32>
    %209 = tpu.matmul %207, %208, %cst_70 {dimension_numbers = #tpu.dot_dimension_numbers<[1], [0], [0], [1], [0, 0, 1, 1], [], []>} : vector<16x64xf32>, vector<64x32xf32>, vector<16x32xf32> -> vector<16x32xf32>
    %c429 = arith.constant 429 : index
    %c0_71 = arith.constant 0 : index
    %210 = vector.load %arg2[%c429, %c0_71] : memref<440x128xf32, #tpu.memory_space<vmem>>, vector<1x32xf32>
    %211 = vector.broadcast %210 : vector<1x32xf32> to vector<16x32xf32>
    %212 = arith.addf %209, %211 : vector<16x32xf32>
    %213 = arith.addf %200, %212 : vector<16x32xf32>
    %c430 = arith.constant 430 : index
    %c0_72 = arith.constant 0 : index
    %214 = vector.load %arg2[%c430, %c0_72] : memref<440x128xf32, #tpu.memory_space<vmem>>, vector<1x32xf32>
    %c431 = arith.constant 431 : index
    %c0_73 = arith.constant 0 : index
    %215 = vector.load %arg2[%c431, %c0_73] : memref<440x128xf32, #tpu.memory_space<vmem>>, vector<1x32xf32>
    %cst_74 = arith.constant dense<0.000000e+00> : vector<16xf32>
    %216 = vector.multi_reduction <add>, %213, %cst_74 [1] : vector<16x32xf32> to vector<16xf32>
    %217 = vector.shape_cast %216 : vector<16xf32> to vector<16x1xf32>
    %cst_75 = arith.constant 3.200000e+01 : f32
    %218 = vector.broadcast %cst_75 : f32 to vector<16x1xf32>
    %219 = arith.divf %217, %218 : vector<16x1xf32>
    %220 = vector.broadcast %219 : vector<16x1xf32> to vector<16x32xf32>
    %221 = arith.subf %213, %220 : vector<16x32xf32>
    %222 = arith.mulf %221, %221 : vector<16x32xf32>
    %cst_76 = arith.constant dense<0.000000e+00> : vector<16xf32>
    %223 = vector.multi_reduction <add>, %222, %cst_76 [1] : vector<16x32xf32> to vector<16xf32>
    %224 = vector.shape_cast %223 : vector<16xf32> to vector<16x1xf32>
    %cst_77 = arith.constant 3.200000e+01 : f32
    %225 = vector.broadcast %cst_77 : f32 to vector<16x1xf32>
    %226 = arith.divf %224, %225 : vector<16x1xf32>
    %227 = vector.broadcast %219 : vector<16x1xf32> to vector<16x32xf32>
    %228 = arith.subf %213, %227 : vector<16x32xf32>
    %cst_78 = arith.constant 9.99999974E-6 : f32
    %229 = vector.broadcast %cst_78 : f32 to vector<16x1xf32>
    %230 = arith.addf %226, %229 : vector<16x1xf32>
    %231 = math.rsqrt %230 : vector<16x1xf32>
    %232 = vector.broadcast %231 : vector<16x1xf32> to vector<16x32xf32>
    %233 = arith.mulf %228, %232 : vector<16x32xf32>
    %234 = vector.broadcast %214 : vector<1x32xf32> to vector<16x32xf32>
    %235 = arith.mulf %233, %234 : vector<16x32xf32>
    %236 = vector.broadcast %215 : vector<1x32xf32> to vector<16x32xf32>
    %237 = arith.addf %235, %236 : vector<16x32xf32>
    %238 = vector.extract_strided_slice %237 {offsets = [0, 0], sizes = [8, 32], strides = [1, 1]} : vector<16x32xf32> to vector<8x32xf32>
    %cst_79 = arith.constant dense<0.000000e+00> : vector<32xf32>
    %239 = vector.multi_reduction <add>, %238, %cst_79 [0] : vector<8x32xf32> to vector<32xf32>
    %240 = vector.shape_cast %239 : vector<32xf32> to vector<1x32xf32>
    %cst_80 = arith.constant 8.000000e+00 : f32
    %241 = vector.broadcast %cst_80 : f32 to vector<1x32xf32>
    %242 = arith.divf %240, %241 : vector<1x32xf32>
    %243 = vector.extract_strided_slice %237 {offsets = [8, 0], sizes = [8, 32], strides = [1, 1]} : vector<16x32xf32> to vector<8x32xf32>
    %cst_81 = arith.constant dense<0.000000e+00> : vector<32xf32>
    %244 = vector.multi_reduction <add>, %243, %cst_81 [0] : vector<8x32xf32> to vector<32xf32>
    %245 = vector.shape_cast %244 : vector<32xf32> to vector<1x32xf32>
    %cst_82 = arith.constant 8.000000e+00 : f32
    %246 = vector.broadcast %cst_82 : f32 to vector<1x32xf32>
    %247 = arith.divf %245, %246 : vector<1x32xf32>
    %248 = tpu.concatenate %242, %247 in 0 : vector<1x32xf32>, vector<1x32xf32> -> vector<2x32xf32>
    %c432 = arith.constant 432 : index
    %c0_83 = arith.constant 0 : index
    %249 = vector.load %arg2[%c432, %c0_83] : memref<440x128xf32, #tpu.memory_space<vmem>>, vector<1x32xf32>
    %250 = vector.broadcast %249 : vector<1x32xf32> to vector<2x32xf32>
    %251 = arith.mulf %248, %250 : vector<2x32xf32>
    %cst_84 = arith.constant dense<0.000000e+00> : vector<2xf32>
    %252 = vector.multi_reduction <add>, %251, %cst_84 [1] : vector<2x32xf32> to vector<2xf32>
    %253 = vector.shape_cast %252 : vector<2xf32> to vector<2x1xf32>
    %c433 = arith.constant 433 : index
    %c0_85 = arith.constant 0 : index
    %254 = vector.load %arg2[%c433, %c0_85] : memref<440x128xf32, #tpu.memory_space<vmem>>, vector<1x1xf32>
    %255 = vector.broadcast %254 : vector<1x1xf32> to vector<2x1xf32>
    %256 = arith.addf %253, %255 : vector<2x1xf32>
    %c0_86 = arith.constant 0 : index
    %c0_87 = arith.constant 0 : index
    %257 = vector.load %arg3[%c0_86, %c0_87] : memref<2x1xf32, #tpu.memory_space<vmem>>, vector<2x1xf32>
    tpu.vector_store %arg3[%c0_86, %c0_87], %256 {strides = array<i32>} : memref<2x1xf32, #tpu.memory_space<vmem>>, vector<2x1xf32>,
    return
  }
  func.func @transform_0(%arg0: i32) -> (i32, i32) {
    %c0_i32 = arith.constant 0 : i32
    %c0_i32_0 = arith.constant 0 : i32
    %c0_i32_1 = arith.constant 0 : i32
    return %c0_i32, %c0_i32_0 : i32, i32
  }
  func.func @transform_1(%arg0: i32) -> (i32, i32) {
    %c0_i32 = arith.constant 0 : i32
    %c0_i32_0 = arith.constant 0 : i32
    %c0_i32_1 = arith.constant 0 : i32
    return %c0_i32, %c0_i32_0 : i32, i32
  }
  func.func @transform_2(%arg0: i32) -> (i32, i32) {
    %c0_i32 = arith.constant 0 : i32
    %c0_i32_0 = arith.constant 0 : i32
    %c0_i32_1 = arith.constant 0 : i32
    return %c0_i32, %c0_i32_0 : i32, i32
  }
}

</mosaic_0001>

<llo_original>
// kernel: transformer_forward.1
$region0: #{transformer_forward.1}
  #allocation0 [shape = 'u32[]', space=smem, size = 0x4, offset = 0x4, fixed_abs, tag = 'smem constant byte address 0x4 - core index']
  #allocation1 [shape = 'u32[144,128]{1,0:T(1,128)}', space=vmem, size = 0x12000, scoped, tag = 'internal scratch']
  %s0 = inlined_call_operand.hbm [shape: f32[16,16], index: 0, kind: input, shape index: {}]
  %s1 = inlined_call_operand.hbm [shape: f32[440,128], index: 1, kind: input, shape index: {}]
  %s2 = inlined_call_operand.vmem [shape: f32[2,1], index: 2, kind: output, shape index: {}]
  %s3 = sld [smem:[#allocation0]]
  $region26: #{transformer_forward.1} parent=0
    _
  %s5 = ssub.s32 1, %s3
  %s6 = scalar_select 0, %s5, %s3
  $region1: #{transformer_forward.1} parent=0
    #allocation2 [shape = 'u8[8192]{0}', space=vmem, size = 0x2000, scoped, tag = 'input window, operand 0, single buffered']
    #allocation3 [shape = 's32[1]{0}', space=sflag, size = 0x4, scoped, tag = 'scoped memory for transformer_forward.1']
    #allocation4 [shape = 'u8[225280]{0}', space=vmem, size = 0x37000, scoped, tag = 'input window, operand 1, single buffered']
    #allocation5 [shape = 's32[1]{0}', space=sflag, size = 0x4, scoped, tag = 'scoped memory for transformer_forward.1']
    %7 = vsyncpa [#allocation3], 0
    %8 = vsyncpa [#allocation5], 0
    // Predicated region
    $region2: #{transformer_forward.1} parent=1 // pred_check
      _
    $region3: #{transformer_forward.1} parent=1 // pred_check_branch
      %10 = sbr.rel (0) target = $region5
    $region4: #{transformer_forward.1} parent=1 // pred_region
      %s12 = ssub.s32 256, 256
      %13 = vsyncadd [#allocation3], %s12
      %s14 = sshll.u32 [#allocation2], 4
      %s15 = int_to_ptr.vmem [resolvable:$true] %s14
      %20 = dma.hbm_to_vmem [thread:$0]  %s0, 256, %s15, [#allocation3], 128, 128, 8
    $region5: #{transformer_forward.1} parent=1 // pred_fallthru
      _
    // Predicated region
    $region6: #{transformer_forward.1} parent=1 // pred_check
      _
    $region7: #{transformer_forward.1} parent=1 // pred_check_branch
      %22 = sbr.rel (0) target = $region9
    $region8: #{transformer_forward.1} parent=1 // pred_region
      %s24 = ssub.s32 7040, 7040
      %25 = vsyncadd [#allocation5], %s24
      %s26 = sshll.u32 [#allocation4], 4
      %s27 = int_to_ptr.vmem [resolvable:$true] %s26
      %32 = dma.hbm_to_vmem [thread:$0]  %s1, 7040, %s27, [#allocation5], 128, 128, 8
    $region9: #{transformer_forward.1} parent=1 // pred_fallthru
      _
    // Predicated region
    $region10: #{transformer_forward.1} parent=1 // pred_check
      _
    $region11: #{transformer_forward.1} parent=1 // pred_check_branch
      %34 = sbr.rel (0) target = $region13
    $region12: #{transformer_forward.1} parent=1 // pred_region
      %35 = dma.done [#allocation3], 256
    $region13: #{transformer_forward.1} parent=1 // pred_fallthru
      _
    // Predicated region
    $region14: #{transformer_forward.1} parent=1 // pred_check
      _
    $region15: #{transformer_forward.1} parent=1 // pred_check_branch
      %37 = sbr.rel (0) target = $region17
    $region16: #{transformer_forward.1} parent=1 // pred_region
      %38 = dma.done [#allocation5], 7040
    $region17: #{transformer_forward.1} parent=1 // pred_fallthru
      _
    %v39 = vld [vmem:[#allocation2] sm:$0xff]
    %v40 = vld [vmem:[#allocation2 + $0x8] sm:$0xff]
    %v41 = vld [vmem:[#allocation4] sm:$0xff]
    %v42 = vld [vmem:[#allocation4 + $0x8] sm:$0xff]
    %v43 = vld [vmem:[#allocation4 + $0x10] sm:$0xff]
    %v44 = vld [vmem:[#allocation4 + $0x18] sm:$0xff]
    %vm45 = vcmask 130048
    %v47 = vsel %vm45, %v39, 0
    %v50 = vsel %vm45, %v40, 0
    %52 = vmatprep.subr.mxu0 0.0
    %53 = vmatpush1.msra.mxu0 %v41
    %54 = vmatprep.subr.mxu0 0.0
    %55 = vmatpush1.msra.mxu0 %v42
    %56 = vmatprep.subr.mxu0 0.0
    %57 = vmatpush1.msra.mxu0 0.0
    %58 = vmatprep.subr.mxu0 0.0
    %59 = vmatpush1.msra.mxu0 0.0
    %60 = vmatprep.subr.mxu0 0.0
    %61 = vmatpush1.msra.mxu0 0.0
    %62 = vmatprep.subr.mxu0 0.0
    %63 = vmatpush1.msra.mxu0 0.0
    %64 = vmatprep.subr.mxu0 0.0
    %65 = vmatpush1.msra.mxu0 0.0
    %66 = vmatprep.subr.mxu0 0.0
    %67 = vmatpush1.msra.mxu0 0.0
    %68 = vmatprep.subr.mxu0 0.0
    %69 = vmatpush1.msra.mxu0 0.0
    %70 = vmatprep.subr.mxu0 0.0
    %71 = vmatpush1.msra.mxu0 0.0
    %72 = vmatprep.subr.mxu0 0.0
    %73 = vmatpush1.msra.mxu0 0.0
    %74 = vmatprep.subr.mxu0 0.0
    %75 = vmatpush1.msra.mxu0 0.0
    %76 = vmatprep.subr.mxu0 0.0
    %77 = vmatpush1.msra.mxu0 0.0
    %78 = vmatprep.subr.mxu0 0.0
    %79 = vmatpush1.msra.mxu0 0.0
    %80 = vmatprep.subr.mxu0 0.0
    %81 = vmatpush1.msra.mxu0 0.0
    %82 = vmatprep.subr.mxu0 0.0
    %83 = vmatpush1.msra.mxu0 0.0
    %84 = vmatprep.subr.mxu0 0.0
    %85 = vmatpush1.msra.mxu0 0.0
    %86 = vmatprep.subr.mxu0 0.0
    %87 = vmatpush1.msra.mxu0 0.0
    %88 = vmatprep.subr.mxu0 0.0
    %89 = vmatpush1.msra.mxu0 0.0
    %90 = vmatprep.subr.mxu0 0.0
    %91 = vmatpush1.msra.mxu0 0.0
    %92 = vmatprep.subr.mxu0 0.0
    %93 = vmatpush1.msra.mxu0 0.0
    %94 = vmatprep.subr.mxu0 0.0
    %95 = vmatpush1.msra.mxu0 0.0
    %96 = vmatprep.subr.mxu0 0.0
    %97 = vmatpush1.msra.mxu0 0.0
    %98 = vmatprep.subr.mxu0 0.0
    %99 = vmatpush1.msra.mxu0 0.0
    %100 = vmatprep.subr.mxu0 0.0
    %101 = vmatpush1.msra.mxu0 0.0
    %102 = vmatprep.subr.mxu0 0.0
    %103 = vmatpush1.msra.mxu0 0.0
    %104 = vmatprep.subr.mxu0 0.0
    %105 = vmatpush1.msra.mxu0 0.0
    %106 = vmatprep.subr.mxu0 0.0
    %107 = vmatpush1.msra.mxu0 0.0
    %108 = vmatprep.subr.mxu0 0.0
    %109 = vmatpush1.msra.mxu0 0.0
    %110 = vmatprep.subr.mxu0 0.0
    %111 = vmatpush1.msra.mxu0 0.0
    %112 = vmatprep.subr.mxu0 0.0
    %113 = vmatpush1.msra.mxu0 0.0
    %114 = vmatprep.subr.mxu0 0.0
    %115 = vmatpush1.msra.mxu0 0.0
    %116 = vmatprep.mubr.f32.mxu0 0.0
    %117 = vmatmul.mubr.f32.gmra.mrb[0].mxu0 %v47
    %v118 = vpop.f32.mrb[0].mxu0
    %v119 = vadd.f32 %v43, %v118
    %v120 = vpop.f32.mrb[0].mxu0
    %121 = vmatprep.mubr.f32.mxu0 0.0
    %122 = vmatmul.mubr.f32.gmra.mrb[0].mxu0 %v50
    %v123 = vpop.f32.mrb[0].mxu0
    %v124 = vadd.f32 %v44, %v123
    %v125 = vpop.f32.mrb[0].mxu0
    %126 = vdwg.mxu0
    %v127 = vld [vmem:[#allocation4 + $0x20] sm:$0xff]
    %v128 = vld [vmem:[#allocation4 + $0x28] sm:$0xff]
    %v129 = vld [vmem:[#allocation4 + $0x30] sm:$0xff]
    %v130 = vld [vmem:[#allocation4 + $0x38] sm:$0xff]
    %v131 = vld [vmem:[#allocation4 + $0x40] sm:$0xff]
    %v132 = vld [vmem:[#allocation4 + $0x48] sm:$0xff]
    %v133 = vld [vmem:[#allocation4 + $0x50] sm:$0xff]
    %v134 = vld [vmem:[#allocation4 + $0x58] sm:$0xff]
    %v135 = vld [vmem:[#allocation4 + $0x60] sm:$0xff]
    %v136 = vld [vmem:[#allocation4 + $0x68] sm:$0xff]
    %v137 = vld [vmem:[#allocation4 + $0x70] sm:$0xff]
    %v138 = vld [vmem:[#allocation4 + $0x78] sm:$0xff]
    %v139 = vld [vmem:[#allocation4 + $0x1a0] sm:$0x1]
    %v140 = vlaneseq
    %v141 = vshrl.u32 %v140, 7
    %v142 = vsub.s32 0, %v141
    %v143 = vrot.slane %v139, %v142
    %vm144 = vcmask 261120
    %v146 = vsel %vm144, %v119, 0
    %v149 = vsel %vm144, %v124, 0
    %151 = vmatprep.subr.mxu0 0.0
    %152 = vmatpush1.msra.mxu0 %v135
    %153 = vmatprep.subr.mxu0 0.0
    %154 = vmatpush1.msra.mxu0 %v136
    %155 = vmatprep.subr.mxu0 0.0
    %156 = vmatpush1.msra.mxu0 %v137
    %157 = vmatprep.subr.mxu0 0.0
    %158 = vmatpush1.msra.mxu0 %v138
    %159 = vmatprep.subr.mxu0 0.0
    %160 = vmatpush1.msra.mxu0 0.0
    %161 = vmatprep.subr.mxu0 0.0
    %162 = vmatpush1.msra.mxu0 0.0
    %163 = vmatprep.subr.mxu0 0.0
    %164 = vmatpush1.msra.mxu0 0.0
    %165 = vmatprep.subr.mxu0 0.0
    %166 = vmatpush1.msra.mxu0 0.0
    %167 = vmatprep.subr.mxu0 0.0
    %168 = vmatpush1.msra.mxu0 0.0
    %169 = vmatprep.subr.mxu0 0.0
    %170 = vmatpush1.msra.mxu0 0.0
    %171 = vmatprep.subr.mxu0 0.0
    %172 = vmatpush1.msra.mxu0 0.0
    %173 = vmatprep.subr.mxu0 0.0
    %174 = vmatpush1.msra.mxu0 0.0
    %175 = vmatprep.subr.mxu0 0.0
    %176 = vmatpush1.msra.mxu0 0.0
    %177 = vmatprep.subr.mxu0 0.0
    %178 = vmatpush1.msra.mxu0 0.0
    %179 = vmatprep.subr.mxu0 0.0
    %180 = vmatpush1.msra.mxu0 0.0
    %181 = vmatprep.subr.mxu0 0.0
    %182 = vmatpush1.msra.mxu0 0.0
    %183 = vmatprep.subr.mxu0 0.0
    %184 = vmatpush1.msra.mxu0 0.0
    %185 = vmatprep.subr.mxu0 0.0
    %186 = vmatpush1.msra.mxu0 0.0
    %187 = vmatprep.subr.mxu0 0.0
    %188 = vmatpush1.msra.mxu0 0.0
    %189 = vmatprep.subr.mxu0 0.0
    %190 = vmatpush1.msra.mxu0 0.0
    %191 = vmatprep.subr.mxu0 0.0
    %192 = vmatpush1.msra.mxu0 0.0
    %193 = vmatprep.subr.mxu0 0.0
    %194 = vmatpush1.msra.mxu0 0.0
    %195 = vmatprep.subr.mxu0 0.0
    %196 = vmatpush1.msra.mxu0 0.0
    %197 = vmatprep.subr.mxu0 0.0
    %198 = vmatpush1.msra.mxu0 0.0
    %199 = vmatprep.subr.mxu0 0.0
    %200 = vmatpush1.msra.mxu0 0.0
    %201 = vmatprep.subr.mxu0 0.0
    %202 = vmatpush1.msra.mxu0 0.0
    %203 = vmatprep.subr.mxu0 0.0
    %204 = vmatpush1.msra.mxu0 0.0
    %205 = vmatprep.subr.mxu0 0.0
    %206 = vmatpush1.msra.mxu0 0.0
    %207 = vmatprep.subr.mxu0 0.0
    %208 = vmatpush1.msra.mxu0 0.0
    %209 = vmatprep.subr.mxu0 0.0
    %210 = vmatpush1.msra.mxu0 0.0
    %211 = vmatprep.subr.mxu0 0.0
    %212 = vmatpush1.msra.mxu0 0.0
    %213 = vmatprep.subr.mxu0 0.0
    %214 = vmatpush1.msra.mxu0 0.0
    %215 = vmatprep.mubr.f32.mxu0 0.0
    %216 = vmatmul.mubr.f32.gmra.mrb[0].mxu0 %v146
    %v217 = vpop.f32.mrb[0].mxu0
    %v218 = vadd.f32 %v143, %v217
    %v219 = vpop.f32.mrb[0].mxu0
    %220 = vmatprep.mubr.f32.mxu0 0.0
    %221 = vmatmul.mubr.f32.gmra.mrb[0].mxu0 %v149
    %v222 = vpop.f32.mrb[0].mxu0
    %v223 = vadd.f32 %v143, %v222
    %v224 = vpop.f32.mrb[0].mxu0
    %225 = vdwg.mxu0
    %228 = vrot.lane.b32.xlu0 %v218, 120
    %v229 = vpop.permute.xlu0 %228
    %230 = vrot.lane.b32.xlu0 %v223, 120
    %v231 = vpop.permute.xlu0 %230
    %232 = vrot.lane.b32.xlu0 %v218, 112
    %v233 = vpop.permute.xlu0 %232
    %234 = vrot.lane.b32.xlu0 %v223, 112
    %v235 = vpop.permute.xlu0 %234
    %236 = vrot.lane.b32.xlu0 %v218, 104
    %v237 = vpop.permute.xlu0 %236
    %238 = vrot.lane.b32.xlu0 %v223, 104
    %v239 = vpop.permute.xlu0 %238
    %240 = vrot.lane.b32.xlu0 %v218, 96
    %v241 = vpop.permute.xlu0 %240
    %242 = vrot.lane.b32.xlu0 %v223, 96
    %v243 = vpop.permute.xlu0 %242
    %244 = vrot.lane.b32.xlu0 %v229, 96
    %v245 = vpop.permute.xlu0 %244
    %246 = vrot.lane.b32.xlu0 %v231, 96
    %v247 = vpop.permute.xlu0 %246
    %248 = vrot.lane.b32.xlu0 %v233, 96
    %v249 = vpop.permute.xlu0 %248
    %250 = vrot.lane.b32.xlu0 %v235, 96
    %v251 = vpop.permute.xlu0 %250
    %252 = vrot.lane.b32.xlu0 %v237, 96
    %v253 = vpop.permute.xlu0 %252
    %254 = vrot.lane.b32.xlu0 %v239, 96
    %v255 = vpop.permute.xlu0 %254
    %vm256 = vcmask 64512
    %v257 = vsel %vm256, %v218, 0
    %v259 = vsel %vm256, %v223, 0
    %v261 = vsel %vm256, %v229, 0
    %v263 = vsel %vm256, %v231, 0
    %v265 = vsel %vm256, %v233, 0
    %v267 = vsel %vm256, %v235, 0
    %v269 = vsel %vm256, %v237, 0
    %v271 = vsel %vm256, %v239, 0
    %v273 = vsel %vm256, %v241, 0
    %v275 = vsel %vm256, %v243, 0
    %v277 = vsel %vm256, %v245, 0
    %v279 = vsel %vm256, %v247, 0
    %v281 = vsel %vm256, %v249, 0
    %v283 = vsel %vm256, %v251, 0
    %v285 = vsel %vm256, %v253, 0
    %v287 = vsel %vm256, %v255, 0
    %289 = vmatprep.subr.mxu0 0.0
    %290 = vmatpush1.xpose.msra.mxu0 %v273
    %291 = vmatprep.subr.mxu0 0.0
    %292 = vmatpush1.xpose.msra.mxu0 %v275
    %293 = vmatprep.subr.mxu0 0.0
    %294 = vmatpush1.xpose.msra.mxu0 %v277
    %295 = vmatprep.subr.mxu0 0.0
    %296 = vmatpush1.xpose.msra.mxu0 %v279
    %297 = vmatprep.subr.mxu0 0.0
    %298 = vmatpush1.xpose.msra.mxu0 %v281
    %299 = vmatprep.subr.mxu0 0.0
    %300 = vmatpush1.xpose.msra.mxu0 %v283
    %301 = vmatprep.subr.mxu0 0.0
    %302 = vmatpush1.xpose.msra.mxu0 %v285
    %303 = vmatprep.subr.mxu0 0.0
    %304 = vmatpush1.xpose.msra.mxu0 %v287
    %305 = vmatprep.subr.mxu0 0.0
    %306 = vmatpush1.xpose.msra.mxu0 0.0
    %307 = vmatprep.subr.mxu0 0.0
    %308 = vmatpush1.xpose.msra.mxu0 0.0
    %309 = vmatprep.subr.mxu0 0.0
    %310 = vmatpush1.xpose.msra.mxu0 0.0
    %311 = vmatprep.subr.mxu0 0.0
    %312 = vmatpush1.xpose.msra.mxu0 0.0
    %313 = vmatprep.subr.mxu0 0.0
    %314 = vmatpush1.xpose.msra.mxu0 0.0
    %315 = vmatprep.subr.mxu0 0.0
    %316 = vmatpush1.xpose.msra.mxu0 0.0
    %317 = vmatprep.subr.mxu0 0.0
    %318 = vmatpush1.xpose.msra.mxu0 0.0
    %319 = vmatprep.subr.mxu0 0.0
    %320 = vmatpush1.xpose.msra.mxu0 0.0
    %321 = vmatprep.subr.mxu0 0.0
    %322 = vmatpush1.xpose.msra.mxu0 0.0
    %323 = vmatprep.subr.mxu0 0.0
    %324 = vmatpush1.xpose.msra.mxu0 0.0
    %325 = vmatprep.subr.mxu0 0.0
    %326 = vmatpush1.xpose.msra.mxu0 0.0
    %327 = vmatprep.subr.mxu0 0.0
    %328 = vmatpush1.xpose.msra.mxu0 0.0
    %329 = vmatprep.subr.mxu0 0.0
    %330 = vmatpush1.xpose.msra.mxu0 0.0
    %331 = vmatprep.subr.mxu0 0.0
    %332 = vmatpush1.xpose.msra.mxu0 0.0
    %333 = vmatprep.subr.mxu0 0.0
    %334 = vmatpush1.xpose.msra.mxu0 0.0
    %335 = vmatprep.subr.mxu0 0.0
    %336 = vmatpush1.xpose.msra.mxu0 0.0
    %337 = vmatprep.subr.mxu0 0.0
    %338 = vmatpush1.xpose.msra.mxu0 0.0
    %339 = vmatprep.subr.mxu0 0.0
    %340 = vmatpush1.xpose.msra.mxu0 0.0
    %341 = vmatprep.subr.mxu0 0.0
    %342 = vmatpush1.xpose.msra.mxu0 0.0
    %343 = vmatprep.subr.mxu0 0.0
    %344 = vmatpush1.xpose.msra.mxu0 0.0
    %345 = vmatprep.subr.mxu0 0.0
    %346 = vmatpush1.xpose.msra.mxu0 0.0
    %347 = vmatprep.subr.mxu0 0.0
    %348 = vmatpush1.xpose.msra.mxu0 0.0
    %349 = vmatprep.subr.mxu0 0.0
    %350 = vmatpush1.xpose.msra.mxu0 0.0
    %351 = vmatprep.subr.mxu0 0.0
    %352 = vmatpush1.xpose.msra.mxu0 0.0
    %353 = vmatprep.mubr.f32.mxu0 0.0
    %354 = vmatmul.mubr.f32.gmra.mrb[0].mxu0 %v257
    %v355 = vpop.f32.mrb[0].mxu0
    %v356 = vadd.f32 %v127, %v355
    %v357 = vpop.f32.mrb[0].mxu0
    %358 = vmatprep.mubr.f32.mxu0 0.0
    %359 = vmatmul.mubr.f32.gmra.mrb[0].mxu0 %v259
    %v360 = vpop.f32.mrb[0].mxu0
    %v361 = vadd.f32 %v128, %v360
    %v362 = vpop.f32.mrb[0].mxu0
    %363 = vmatprep.mubr.f32.mxu0 0.0
    %364 = vmatmul.mubr.f32.gmra.mrb[0].mxu0 %v261
    %v365 = vpop.f32.mrb[0].mxu0
    %v366 = vadd.f32 %v129, %v365
    %v367 = vpop.f32.mrb[0].mxu0
    %368 = vmatprep.mubr.f32.mxu0 0.0
    %369 = vmatmul.mubr.f32.gmra.mrb[0].mxu0 %v263
    %v370 = vpop.f32.mrb[0].mxu0
    %v371 = vadd.f32 %v130, %v370
    %v372 = vpop.f32.mrb[0].mxu0
    %373 = vmatprep.mubr.f32.mxu0 0.0
    %374 = vmatmul.mubr.f32.gmra.mrb[0].mxu0 %v265
    %v375 = vpop.f32.mrb[0].mxu0
    %v376 = vadd.f32 %v131, %v375
    %v377 = vpop.f32.mrb[0].mxu0
    %378 = vmatprep.mubr.f32.mxu0 0.0
    %379 = vmatmul.mubr.f32.gmra.mrb[0].mxu0 %v267
    %v380 = vpop.f32.mrb[0].mxu0
    %v381 = vadd.f32 %v132, %v380
    %v382 = vpop.f32.mrb[0].mxu0
    %383 = vmatprep.mubr.f32.mxu0 0.0
    %384 = vmatmul.mubr.f32.gmra.mrb[0].mxu0 %v269
    %v385 = vpop.f32.mrb[0].mxu0
    %v386 = vadd.f32 %v133, %v385
    %v387 = vpop.f32.mrb[0].mxu0
    %388 = vmatprep.mubr.f32.mxu0 0.0
    %389 = vmatmul.mubr.f32.gmra.mrb[0].mxu0 %v271
    %v390 = vpop.f32.mrb[0].mxu0
    %v391 = vadd.f32 %v134, %v390
    %v392 = vpop.f32.mrb[0].mxu0
    %393 = vdwg.mxu0
    %vm394 = vcmask 523264
    %v395 = vsel %vm394, %v356, -inf
    %396 = vmax.xlane.f32.xlu0 %v395
    %v397 = vpop.xlane.xlu0 %396
    %v398 = vsel %vm394, %v361, -inf
    %399 = vmax.xlane.f32.xlu0 %v398
    %v400 = vpop.xlane.xlu0 %399
    %v401 = vsel %vm394, %v366, -inf
    %402 = vmax.xlane.f32.xlu0 %v401
    %v403 = vpop.xlane.xlu0 %402
    %v404 = vsel %vm394, %v371, -inf
    %405 = vmax.xlane.f32.xlu0 %v404
    %v406 = vpop.xlane.xlu0 %405
    %v407 = vsel %vm394, %v376, -inf
    %408 = vmax.xlane.f32.xlu0 %v407
    %v409 = vpop.xlane.xlu0 %408
    %v410 = vsel %vm394, %v381, -inf
    %411 = vmax.xlane.f32.xlu0 %v410
    %v412 = vpop.xlane.xlu0 %411
    %v413 = vsel %vm394, %v386, -inf
    %414 = vmax.xlane.f32.xlu0 %v413
    %v415 = vpop.xlane.xlu0 %414
    %v416 = vsel %vm394, %v391, -inf
    %417 = vmax.xlane.f32.xlu0 %v416
    %v418 = vpop.xlane.xlu0 %417
    %v419 = vsub.f32 %v356, %v397
    %v420 = vsub.f32 %v361, %v400
    %v421 = vsub.f32 %v366, %v403
    %v422 = vsub.f32 %v371, %v406
    %v423 = vsub.f32 %v376, %v409
    %v424 = vsub.f32 %v381, %v412
    %v425 = vsub.f32 %v386, %v415
    %v426 = vsub.f32 %v391, %v418
    %v427 = vmul.f32 %v419, 1.442695
    %v428 = vpow.pop %v427
    %v429 = vmul.f32 %v420, 1.442695
    %v430 = vpow.pop %v429
    %v431 = vmul.f32 %v421, 1.442695
    %v432 = vpow.pop %v431
    %v433 = vmul.f32 %v422, 1.442695
    %v434 = vpow.pop %v433
    %v435 = vmul.f32 %v423, 1.442695
    %v436 = vpow.pop %v435
    %v437 = vmul.f32 %v424, 1.442695
    %v438 = vpow.pop %v437
    %v439 = vmul.f32 %v425, 1.442695
    %v440 = vpow.pop %v439
    %v441 = vmul.f32 %v426, 1.442695
    %v442 = vpow.pop %v441
    %v443 = vsel %vm394, %v428, 0.0
    %444 = vadd.xlane.f32.xlu0 %v443
    %v445 = vpop.xlane.xlu0 %444
    %v446 = vsel %vm394, %v430, 0.0
    %447 = vadd.xlane.f32.xlu0 %v446
    %v448 = vpop.xlane.xlu0 %447
    %v449 = vsel %vm394, %v432, 0.0
    %450 = vadd.xlane.f32.xlu0 %v449
    %v451 = vpop.xlane.xlu0 %450
    %v452 = vsel %vm394, %v434, 0.0
    %453 = vadd.xlane.f32.xlu0 %v452
    %v454 = vpop.xlane.xlu0 %453
    %v455 = vsel %vm394, %v436, 0.0
    %456 = vadd.xlane.f32.xlu0 %v455
    %v457 = vpop.xlane.xlu0 %456
    %v458 = vsel %vm394, %v438, 0.0
    %459 = vadd.xlane.f32.xlu0 %v458
    %v460 = vpop.xlane.xlu0 %459
    %v461 = vsel %vm394, %v440, 0.0
    %462 = vadd.xlane.f32.xlu0 %v461
    %v463 = vpop.xlane.xlu0 %462
    %v464 = vsel %vm394, %v442, 0.0
    %465 = vadd.xlane.f32.xlu0 %v464
    %v466 = vpop.xlane.xlu0 %465
    %v467 = vrcp.pop %v445
    %v468 = vrcp.pop %v448
    %v469 = vrcp.pop %v451
    %v470 = vrcp.pop %v454
    %v471 = vrcp.pop %v457
    %v472 = vrcp.pop %v460
    %v473 = vrcp.pop %v463
    %v474 = vrcp.pop %v466
    %v475 = vmul.f32 %v428, %v467
    %v476 = vmul.f32 %v430, %v468
    %v477 = vmul.f32 %v432, %v469
    %v478 = vmul.f32 %v434, %v470
    %v479 = vmul.f32 %v436, %v471
    %v480 = vmul.f32 %v438, %v472
    %v481 = vmul.f32 %v440, %v473
    %v482 = vmul.f32 %v442, %v474
    %483 = vrot.lane.b32.xlu0 %v218, 64
    %v484 = vpop.permute.xlu0 %483
    %485 = vrot.lane.b32.xlu0 %v223, 64
    %v486 = vpop.permute.xlu0 %485
    %487 = vrot.lane.b32.xlu0 %v229, 64
    %v488 = vpop.permute.xlu0 %487
    %489 = vrot.lane.b32.xlu0 %v231, 64
    %v490 = vpop.permute.xlu0 %489
    %491 = vrot.lane.b32.xlu0 %v233, 64
    %v492 = vpop.permute.xlu0 %491
    %493 = vrot.lane.b32.xlu0 %v235, 64
    %v494 = vpop.permute.xlu0 %493
    %495 = vrot.lane.b32.xlu0 %v237, 64
    %v496 = vpop.permute.xlu0 %495
    %497 = vrot.lane.b32.xlu0 %v239, 64
    %v498 = vpop.permute.xlu0 %497
    %v508 = vsel %vm394, %v475, 0
    %v511 = vsel %vm394, %v476, 0
    %v514 = vsel %vm394, %v477, 0
    %v517 = vsel %vm394, %v478, 0
    %v520 = vsel %vm394, %v479, 0
    %v523 = vsel %vm394, %v480, 0
    %v526 = vsel %vm394, %v481, 0
    %v529 = vsel %vm394, %v482, 0
    %531 = vmatprep.subr.mxu0 0.0
    %532 = vmatpush1.msra.mxu0 %v484
    %533 = vmatprep.subr.mxu0 0.0
    %534 = vmatpush1.msra.mxu0 %v486
    %535 = vmatprep.subr.mxu0 0.0
    %536 = vmatpush1.msra.mxu0 %v488
    %537 = vmatprep.subr.mxu0 0.0
    %538 = vmatpush1.msra.mxu0 %v490
    %539 = vmatprep.subr.mxu0 0.0
    %540 = vmatpush1.msra.mxu0 %v492
    %541 = vmatprep.subr.mxu0 0.0
    %542 = vmatpush1.msra.mxu0 %v494
    %543 = vmatprep.subr.mxu0 0.0
    %544 = vmatpush1.msra.mxu0 %v496
    %545 = vmatprep.subr.mxu0 0.0
    %546 = vmatpush1.msra.mxu0 %v498
    %547 = vmatprep.subr.mxu0 0.0
    %548 = vmatpush1.msra.mxu0 0.0
    %549 = vmatprep.subr.mxu0 0.0
    %550 = vmatpush1.msra.mxu0 0.0
    %551 = vmatprep.subr.mxu0 0.0
    %552 = vmatpush1.msra.mxu0 0.0
    %553 = vmatprep.subr.mxu0 0.0
    %554 = vmatpush1.msra.mxu0 0.0
    %555 = vmatprep.subr.mxu0 0.0
    %556 = vmatpush1.msra.mxu0 0.0
    %557 = vmatprep.subr.mxu0 0.0
    %558 = vmatpush1.msra.mxu0 0.0
    %559 = vmatprep.subr.mxu0 0.0
    %560 = vmatpush1.msra.mxu0 0.0
    %561 = vmatprep.subr.mxu0 0.0
    %562 = vmatpush1.msra.mxu0 0.0
    %563 = vmatprep.subr.mxu0 0.0
    %564 = vmatpush1.msra.mxu0 0.0
    %565 = vmatprep.subr.mxu0 0.0
    %566 = vmatpush1.msra.mxu0 0.0
    %567 = vmatprep.subr.mxu0 0.0
    %568 = vmatpush1.msra.mxu0 0.0
    %569 = vmatprep.subr.mxu0 0.0
    %570 = vmatpush1.msra.mxu0 0.0
    %571 = vmatprep.subr.mxu0 0.0
    %572 = vmatpush1.msra.mxu0 0.0
    %573 = vmatprep.subr.mxu0 0.0
    %574 = vmatpush1.msra.mxu0 0.0
    %575 = vmatprep.subr.mxu0 0.0
    %576 = vmatpush1.msra.mxu0 0.0
    %577 = vmatprep.subr.mxu0 0.0
    %578 = vmatpush1.msra.mxu0 0.0
    %579 = vmatprep.subr.mxu0 0.0
    %580 = vmatpush1.msra.mxu0 0.0
    %581 = vmatprep.subr.mxu0 0.0
    %582 = vmatpush1.msra.mxu0 0.0
    %583 = vmatprep.subr.mxu0 0.0
    %584 = vmatpush1.msra.mxu0 0.0
    %585 = vmatprep.subr.mxu0 0.0
    %586 = vmatpush1.msra.mxu0 0.0
    %587 = vmatprep.subr.mxu0 0.0
    %588 = vmatpush1.msra.mxu0 0.0
    %589 = vmatprep.subr.mxu0 0.0
    %590 = vmatpush1.msra.mxu0 0.0
    %591 = vmatprep.subr.mxu0 0.0
    %592 = vmatpush1.msra.mxu0 0.0
    %593 = vmatprep.subr.mxu0 0.0
    %594 = vmatpush1.msra.mxu0 0.0
    %595 = vmatprep.mubr.f32.mxu0 0.0
    %596 = vmatmul.mubr.f32.gmra.mrb[0].mxu0 %v508
    %v597 = vpop.f32.mrb[0].mxu0
    %v598 = vadd.f32 0.0, %v597
    %v599 = vpop.f32.mrb[0].mxu0
    %600 = vmatprep.mubr.f32.mxu0 0.0
    %601 = vmatmul.mubr.f32.gmra.mrb[0].mxu0 %v511
    %v602 = vpop.f32.mrb[0].mxu0
    %v603 = vadd.f32 0.0, %v602
    %v604 = vpop.f32.mrb[0].mxu0
    %605 = vmatprep.mubr.f32.mxu0 0.0
    %606 = vmatmul.mubr.f32.gmra.mrb[0].mxu0 %v514
    %v607 = vpop.f32.mrb[0].mxu0
    %v608 = vadd.f32 0.0, %v607
    %v609 = vpop.f32.mrb[0].mxu0
    %610 = vmatprep.mubr.f32.mxu0 0.0
    %611 = vmatmul.mubr.f32.gmra.mrb[0].mxu0 %v517
    %v612 = vpop.f32.mrb[0].mxu0
    %v613 = vadd.f32 0.0, %v612
    %v614 = vpop.f32.mrb[0].mxu0
    %615 = vmatprep.mubr.f32.mxu0 0.0
    %616 = vmatmul.mubr.f32.gmra.mrb[0].mxu0 %v520
    %v617 = vpop.f32.mrb[0].mxu0
    %v618 = vadd.f32 0.0, %v617
    %v619 = vpop.f32.mrb[0].mxu0
    %620 = vmatprep.mubr.f32.mxu0 0.0
    %621 = vmatmul.mubr.f32.gmra.mrb[0].mxu0 %v523
    %v622 = vpop.f32.mrb[0].mxu0
    %v623 = vadd.f32 0.0, %v622
    %v624 = vpop.f32.mrb[0].mxu0
    %625 = vmatprep.mubr.f32.mxu0 0.0
    %626 = vmatmul.mubr.f32.gmra.mrb[0].mxu0 %v526
    %v627 = vpop.f32.mrb[0].mxu0
    %v628 = vadd.f32 0.0, %v627
    %v629 = vpop.f32.mrb[0].mxu0
    %630 = vmatprep.mubr.f32.mxu0 0.0
    %631 = vmatmul.mubr.f32.gmra.mrb[0].mxu0 %v529
    %v632 = vpop.f32.mrb[0].mxu0
    %v633 = vadd.f32 0.0, %v632
    %v634 = vpop.f32.mrb[0].mxu0
    %635 = vdwg.mxu0
    %v636 = vld [vmem:[#allocation4 + $0x80] sm:$0xff]
    %v637 = vld [vmem:[#allocation4 + $0x88] sm:$0xff]
    %v639 = vsel %vm256, %v608, 0
    %v642 = vsel %vm256, %v613, 0
    %644 = vmatprep.subr.mxu0 0.0
    %645 = vmatpush1.msra.mxu0 %v637
    %646 = vmatprep.subr.mxu0 0.0
    %647 = vmatpush1.msra.mxu0 0.0
    %648 = vmatprep.subr.mxu0 0.0
    %649 = vmatpush1.msra.mxu0 0.0
    %650 = vmatprep.subr.mxu0 0.0
    %651 = vmatpush1.msra.mxu0 0.0
    %652 = vmatprep.subr.mxu0 0.0
    %653 = vmatpush1.msra.mxu0 0.0
    %654 = vmatprep.subr.mxu0 0.0
    %655 = vmatpush1.msra.mxu0 0.0
    %656 = vmatprep.subr.mxu0 0.0
    %657 = vmatpush1.msra.mxu0 0.0
    %658 = vmatprep.subr.mxu0 0.0
    %659 = vmatpush1.msra.mxu0 0.0
    %660 = vmatprep.subr.mxu0 0.0
    %661 = vmatpush1.msra.mxu0 0.0
    %662 = vmatprep.subr.mxu0 0.0
    %663 = vmatpush1.msra.mxu0 0.0
    %664 = vmatprep.subr.mxu0 0.0
    %665 = vmatpush1.msra.mxu0 0.0
    %666 = vmatprep.subr.mxu0 0.0
    %667 = vmatpush1.msra.mxu0 0.0
    %668 = vmatprep.subr.mxu0 0.0
    %669 = vmatpush1.msra.mxu0 0.0
    %670 = vmatprep.subr.mxu0 0.0
    %671 = vmatpush1.msra.mxu0 0.0
    %672 = vmatprep.subr.mxu0 0.0
    %673 = vmatpush1.msra.mxu0 0.0
    %674 = vmatprep.subr.mxu0 0.0
    %675 = vmatpush1.msra.mxu0 0.0
    %676 = vmatprep.subr.mxu0 0.0
    %677 = vmatpush1.msra.mxu0 0.0
    %678 = vmatprep.subr.mxu0 0.0
    %679 = vmatpush1.msra.mxu0 0.0
    %680 = vmatprep.subr.mxu0 0.0
    %681 = vmatpush1.msra.mxu0 0.0
    %682 = vmatprep.subr.mxu0 0.0
    %683 = vmatpush1.msra.mxu0 0.0
    %684 = vmatprep.subr.mxu0 0.0
    %685 = vmatpush1.msra.mxu0 0.0
    %686 = vmatprep.subr.mxu0 0.0
    %687 = vmatpush1.msra.mxu0 0.0
    %688 = vmatprep.subr.mxu0 0.0
    %689 = vmatpush1.msra.mxu0 0.0
    %690 = vmatprep.subr.mxu0 0.0
    %691 = vmatpush1.msra.mxu0 0.0
    %692 = vmatprep.subr.mxu0 0.0
    %693 = vmatpush1.msra.mxu0 0.0
    %694 = vmatprep.subr.mxu0 0.0
    %695 = vmatpush1.msra.mxu0 0.0
    %696 = vmatprep.subr.mxu0 0.0
    %697 = vmatpush1.msra.mxu0 0.0
    %698 = vmatprep.subr.mxu0 0.0
    %699 = vmatpush1.msra.mxu0 0.0
    %700 = vmatprep.subr.mxu0 0.0
    %701 = vmatpush1.msra.mxu0 0.0
    %702 = vmatprep.subr.mxu0 0.0
    %703 = vmatpush1.msra.mxu0 0.0
    %704 = vmatprep.subr.mxu0 0.0
    %705 = vmatpush1.msra.mxu0 0.0
    %706 = vmatprep.subr.mxu0 0.0
    %707 = vmatpush1.msra.mxu0 0.0
    %708 = vmatprep.mubr.f32.mxu0 0.0
    %709 = vmatmul.mubr.f32.gmra.mrb[0].mxu0 %v639
    %v710 = vpop.f32.mrb[0].mxu0
    %v711 = vadd.f32 0.0, %v710
    %v712 = vpop.f32.mrb[0].mxu0
    %713 = vmatprep.mubr.f32.mxu0 0.0
    %714 = vmatmul.mubr.f32.gmra.mrb[0].mxu0 %v642
    %v715 = vpop.f32.mrb[0].mxu0
    %v716 = vadd.f32 0.0, %v715
    %v717 = vpop.f32.mrb[0].mxu0
    %718 = vdwg.mxu0
    %v720 = vsel %vm256, %v598, 0
    %v723 = vsel %vm256, %v603, 0
    %725 = vmatprep.subr.mxu0 0.0
    %726 = vmatpush1.msra.mxu0 %v636
    %727 = vmatprep.subr.mxu0 0.0
    %728 = vmatpush1.msra.mxu0 0.0
    %729 = vmatprep.subr.mxu0 0.0
    %730 = vmatpush1.msra.mxu0 0.0
    %731 = vmatprep.subr.mxu0 0.0
    %732 = vmatpush1.msra.mxu0 0.0
    %733 = vmatprep.subr.mxu0 0.0
    %734 = vmatpush1.msra.mxu0 0.0
    %735 = vmatprep.subr.mxu0 0.0
    %736 = vmatpush1.msra.mxu0 0.0
    %737 = vmatprep.subr.mxu0 0.0
    %738 = vmatpush1.msra.mxu0 0.0
    %739 = vmatprep.subr.mxu0 0.0
    %740 = vmatpush1.msra.mxu0 0.0
    %741 = vmatprep.subr.mxu0 0.0
    %742 = vmatpush1.msra.mxu0 0.0
    %743 = vmatprep.subr.mxu0 0.0
    %744 = vmatpush1.msra.mxu0 0.0
    %745 = vmatprep.subr.mxu0 0.0
    %746 = vmatpush1.msra.mxu0 0.0
    %747 = vmatprep.subr.mxu0 0.0
    %748 = vmatpush1.msra.mxu0 0.0
    %749 = vmatprep.subr.mxu0 0.0
    %750 = vmatpush1.msra.mxu0 0.0
    %751 = vmatprep.subr.mxu0 0.0
    %752 = vmatpush1.msra.mxu0 0.0
    %753 = vmatprep.subr.mxu0 0.0
    %754 = vmatpush1.msra.mxu0 0.0
    %755 = vmatprep.subr.mxu0 0.0
    %756 = vmatpush1.msra.mxu0 0.0
    %757 = vmatprep.subr.mxu0 0.0
    %758 = vmatpush1.msra.mxu0 0.0
    %759 = vmatprep.subr.mxu0 0.0
    %760 = vmatpush1.msra.mxu0 0.0
    %761 = vmatprep.subr.mxu0 0.0
    %762 = vmatpush1.msra.mxu0 0.0
    %763 = vmatprep.subr.mxu0 0.0
    %764 = vmatpush1.msra.mxu0 0.0
    %765 = vmatprep.subr.mxu0 0.0
    %766 = vmatpush1.msra.mxu0 0.0
    %767 = vmatprep.subr.mxu0 0.0
    %768 = vmatpush1.msra.mxu0 0.0
    %769 = vmatprep.subr.mxu0 0.0
    %770 = vmatpush1.msra.mxu0 0.0
    %771 = vmatprep.subr.mxu0 0.0
    %772 = vmatpush1.msra.mxu0 0.0
    %773 = vmatprep.subr.mxu0 0.0
    %774 = vmatpush1.msra.mxu0 0.0
    %775 = vmatprep.subr.mxu0 0.0
    %776 = vmatpush1.msra.mxu0 0.0
    %777 = vmatprep.subr.mxu0 0.0
    %778 = vmatpush1.msra.mxu0 0.0
    %779 = vmatprep.subr.mxu0 0.0
    %780 = vmatpush1.msra.mxu0 0.0
    %781 = vmatprep.subr.mxu0 0.0
    %782 = vmatpush1.msra.mxu0 0.0
    %783 = vmatprep.subr.mxu0 0.0
    %784 = vmatpush1.msra.mxu0 0.0
    %785 = vmatprep.subr.mxu0 0.0
    %786 = vmatpush1.msra.mxu0 0.0
    %787 = vmatprep.subr.mxu0 0.0
    %788 = vmatpush1.msra.mxu0 0.0
    %789 = vmatprep.mubr.f32.mxu0 0.0
    %790 = vmatmul.mubr.f32.gmra.mrb[0].mxu0 %v720
    %v791 = vpop.f32.mrb[0].mxu0
    %v792 = vadd.f32 %v711, %v791
    %v793 = vpop.f32.mrb[0].mxu0
    %794 = vmatprep.mubr.f32.mxu0 0.0
    %795 = vmatmul.mubr.f32.gmra.mrb[0].mxu0 %v723
    %v796 = vpop.f32.mrb[0].mxu0
    %v797 = vadd.f32 %v716, %v796
    %v798 = vpop.f32.mrb[0].mxu0
    %799 = vdwg.mxu0
    %v800 = vld [vmem:[#allocation4 + $0x90] sm:$0xff]
    %v802 = vsel %vm256, %v618, 0
    %v805 = vsel %vm256, %v623, 0
    %807 = vmatprep.subr.mxu0 0.0
    %808 = vmatpush1.msra.mxu0 %v800
    %809 = vmatprep.subr.mxu0 0.0
    %810 = vmatpush1.msra.mxu0 0.0
    %811 = vmatprep.subr.mxu0 0.0
    %812 = vmatpush1.msra.mxu0 0.0
    %813 = vmatprep.subr.mxu0 0.0
    %814 = vmatpush1.msra.mxu0 0.0
    %815 = vmatprep.subr.mxu0 0.0
    %816 = vmatpush1.msra.mxu0 0.0
    %817 = vmatprep.subr.mxu0 0.0
    %818 = vmatpush1.msra.mxu0 0.0
    %819 = vmatprep.subr.mxu0 0.0
    %820 = vmatpush1.msra.mxu0 0.0
    %821 = vmatprep.subr.mxu0 0.0
    %822 = vmatpush1.msra.mxu0 0.0
    %823 = vmatprep.subr.mxu0 0.0
    %824 = vmatpush1.msra.mxu0 0.0
    %825 = vmatprep.subr.mxu0 0.0
    %826 = vmatpush1.msra.mxu0 0.0
    %827 = vmatprep.subr.mxu0 0.0
    %828 = vmatpush1.msra.mxu0 0.0
    %829 = vmatprep.subr.mxu0 0.0
    %830 = vmatpush1.msra.mxu0 0.0
    %831 = vmatprep.subr.mxu0 0.0
    %832 = vmatpush1.msra.mxu0 0.0
    %833 = vmatprep.subr.mxu0 0.0
    %834 = vmatpush1.msra.mxu0 0.0
    %835 = vmatprep.subr.mxu0 0.0
    %836 = vmatpush1.msra.mxu0 0.0
    %837 = vmatprep.subr.mxu0 0.0
    %838 = vmatpush1.msra.mxu0 0.0
    %839 = vmatprep.subr.mxu0 0.0
    %840 = vmatpush1.msra.mxu0 0.0
    %841 = vmatprep.subr.mxu0 0.0
    %842 = vmatpush1.msra.mxu0 0.0
    %843 = vmatprep.subr.mxu0 0.0
    %844 = vmatpush1.msra.mxu0 0.0
    %845 = vmatprep.subr.mxu0 0.0
    %846 = vmatpush1.msra.mxu0 0.0
    %847 = vmatprep.subr.mxu0 0.0
    %848 = vmatpush1.msra.mxu0 0.0
    %849 = vmatprep.subr.mxu0 0.0
    %850 = vmatpush1.msra.mxu0 0.0
    %851 = vmatprep.subr.mxu0 0.0
    %852 = vmatpush1.msra.mxu0 0.0
    %853 = vmatprep.subr.mxu0 0.0
    %854 = vmatpush1.msra.mxu0 0.0
    %855 = vmatprep.subr.mxu0 0.0
    %856 = vmatpush1.msra.mxu0 0.0
    %857 = vmatprep.subr.mxu0 0.0
    %858 = vmatpush1.msra.mxu0 0.0
    %859 = vmatprep.subr.mxu0 0.0
    %860 = vmatpush1.msra.mxu0 0.0
    %861 = vmatprep.subr.mxu0 0.0
    %862 = vmatpush1.msra.mxu0 0.0
    %863 = vmatprep.subr.mxu0 0.0
    %864 = vmatpush1.msra.mxu0 0.0
    %865 = vmatprep.subr.mxu0 0.0
    %866 = vmatpush1.msra.mxu0 0.0
    %867 = vmatprep.subr.mxu0 0.0
    %868 = vmatpush1.msra.mxu0 0.0
    %869 = vmatprep.subr.mxu0 0.0
    %870 = vmatpush1.msra.mxu0 0.0
    %871 = vmatprep.mubr.f32.mxu0 0.0
    %872 = vmatmul.mubr.f32.gmra.mrb[0].mxu0 %v802
    %v873 = vpop.f32.mrb[0].mxu0
    %v874 = vadd.f32 0.0, %v873
    %v875 = vpop.f32.mrb[0].mxu0
    %876 = vmatprep.mubr.f32.mxu0 0.0
    %877 = vmatmul.mubr.f32.gmra.mrb[0].mxu0 %v805
    %v878 = vpop.f32.mrb[0].mxu0
    %v879 = vadd.f32 0.0, %v878
    %v880 = vpop.f32.mrb[0].mxu0
    %881 = vdwg.mxu0
    %v882 = vadd.f32 %v792, %v874
    %v883 = vadd.f32 %v797, %v879
    %v884 = vld [vmem:[#allocation4 + $0x98] sm:$0xff]
    %v886 = vsel %vm256, %v628, 0
    %v889 = vsel %vm256, %v633, 0
    %891 = vmatprep.subr.mxu0 0.0
    %892 = vmatpush1.msra.mxu0 %v884
    %893 = vmatprep.subr.mxu0 0.0
    %894 = vmatpush1.msra.mxu0 0.0
    %895 = vmatprep.subr.mxu0 0.0
    %896 = vmatpush1.msra.mxu0 0.0
    %897 = vmatprep.subr.mxu0 0.0
    %898 = vmatpush1.msra.mxu0 0.0
    %899 = vmatprep.subr.mxu0 0.0
    %900 = vmatpush1.msra.mxu0 0.0
    %901 = vmatprep.subr.mxu0 0.0
    %902 = vmatpush1.msra.mxu0 0.0
    %903 = vmatprep.subr.mxu0 0.0
    %904 = vmatpush1.msra.mxu0 0.0
    %905 = vmatprep.subr.mxu0 0.0
    %906 = vmatpush1.msra.mxu0 0.0
    %907 = vmatprep.subr.mxu0 0.0
    %908 = vmatpush1.msra.mxu0 0.0
    %909 = vmatprep.subr.mxu0 0.0
    %910 = vmatpush1.msra.mxu0 0.0
    %911 = vmatprep.subr.mxu0 0.0
    %912 = vmatpush1.msra.mxu0 0.0
    %913 = vmatprep.subr.mxu0 0.0
    %914 = vmatpush1.msra.mxu0 0.0
    %915 = vmatprep.subr.mxu0 0.0
    %916 = vmatpush1.msra.mxu0 0.0
    %917 = vmatprep.subr.mxu0 0.0
    %918 = vmatpush1.msra.mxu0 0.0
    %919 = vmatprep.subr.mxu0 0.0
    %920 = vmatpush1.msra.mxu0 0.0
    %921 = vmatprep.subr.mxu0 0.0
    %922 = vmatpush1.msra.mxu0 0.0
    %923 = vmatprep.subr.mxu0 0.0
    %924 = vmatpush1.msra.mxu0 0.0
    %925 = vmatprep.subr.mxu0 0.0
    %926 = vmatpush1.msra.mxu0 0.0
    %927 = vmatprep.subr.mxu0 0.0
    %928 = vmatpush1.msra.mxu0 0.0
    %929 = vmatprep.subr.mxu0 0.0
    %930 = vmatpush1.msra.mxu0 0.0
    %931 = vmatprep.subr.mxu0 0.0
    %932 = vmatpush1.msra.mxu0 0.0
    %933 = vmatprep.subr.mxu0 0.0
    %934 = vmatpush1.msra.mxu0 0.0
    %935 = vmatprep.subr.mxu0 0.0
    %936 = vmatpush1.msra.mxu0 0.0
    %937 = vmatprep.subr.mxu0 0.0
    %938 = vmatpush1.msra.mxu0 0.0
    %939 = vmatprep.subr.mxu0 0.0
    %940 = vmatpush1.msra.mxu0 0.0
    %941 = vmatprep.subr.mxu0 0.0
    %942 = vmatpush1.msra.mxu0 0.0
    %943 = vmatprep.subr.mxu0 0.0
    %944 = vmatpush1.msra.mxu0 0.0
    %945 = vmatprep.subr.mxu0 0.0
    %946 = vmatpush1.msra.mxu0 0.0
    %947 = vmatprep.subr.mxu0 0.0
    %948 = vmatpush1.msra.mxu0 0.0
    %949 = vmatprep.subr.mxu0 0.0
    %950 = vmatpush1.msra.mxu0 0.0
    %951 = vmatprep.subr.mxu0 0.0
    %952 = vmatpush1.msra.mxu0 0.0
    %953 = vmatprep.subr.mxu0 0.0
    %954 = vmatpush1.msra.mxu0 0.0
    %955 = vmatprep.mubr.f32.mxu0 0.0
    %956 = vmatmul.mubr.f32.gmra.mrb[0].mxu0 %v886
    %v957 = vpop.f32.mrb[0].mxu0
    %v958 = vadd.f32 0.0, %v957
    %v959 = vpop.f32.mrb[0].mxu0
    %960 = vmatprep.mubr.f32.mxu0 0.0
    %961 = vmatmul.mubr.f32.gmra.mrb[0].mxu0 %v889
    %v962 = vpop.f32.mrb[0].mxu0
    %v963 = vadd.f32 0.0, %v962
    %v964 = vpop.f32.mrb[0].mxu0
    %965 = vdwg.mxu0
    %v966 = vadd.f32 %v882, %v958
    %v967 = vadd.f32 %v883, %v963
    %v968 = vld [vmem:[#allocation4 + $0x1a1] sm:$0x1]
    %v969 = vlaneseq
    %v970 = vshrl.u32 %v969, 7
    %v971 = vsub.s32 0, %v970
    %v972 = vrot.slane %v968, %v971
    %v973 = vadd.f32 %v966, %v972
    %v974 = vadd.f32 %v967, %v972
    %v975 = vadd.f32 %v119, %v973
    %v976 = vadd.f32 %v124, %v974
    %v977 = vld [vmem:[#allocation4 + $0x1a2] sm:$0x1]
    %v978 = vld [vmem:[#allocation4 + $0x1a3] sm:$0x1]
    %v979 = vsel %vm144, %v975, 0.0
    %980 = vadd.xlane.f32.xlu0 %v979
    %v981 = vpop.xlane.xlu0 %980
    %v982 = vsel %vm144, %v976, 0.0
    %983 = vadd.xlane.f32.xlu0 %v982
    %v984 = vpop.xlane.xlu0 %983
    %v985 = vrcp.pop 32.0
    %v986 = vmul.f32 %v981, %v985
    %v987 = vmul.f32 %v984, %v985
    %v988 = vsub.f32 %v975, %v986
    %v989 = vsub.f32 %v976, %v987
    %v990 = vmul.f32 %v988, %v988
    %v991 = vmul.f32 %v989, %v989
    %v992 = vsel %vm144, %v990, 0.0
    %993 = vadd.xlane.f32.xlu0 %v992
    %v994 = vpop.xlane.xlu0 %993
    %v995 = vsel %vm144, %v991, 0.0
    %996 = vadd.xlane.f32.xlu0 %v995
    %v997 = vpop.xlane.xlu0 %996
    %v998 = vmul.f32 %v994, %v985
    %v999 = vmul.f32 %v997, %v985
    %v1000 = vadd.f32 %v998, 1e-05
    %v1001 = vadd.f32 %v999, 1e-05
    %v1002 = vrsqrt.pop %v1000
    %v1003 = vrsqrt.pop %v1001
    %v1004 = vmul.f32 %v988, %v1002
    %v1005 = vmul.f32 %v989, %v1003
    %v1006 = vlaneseq
    %v1007 = vshrl.u32 %v1006, 7
    %v1008 = vsub.s32 0, %v1007
    %v1009 = vrot.slane %v977, %v1008
    %v1010 = vmul.f32 %v1004, %v1009
    %v1011 = vmul.f32 %v1005, %v1009
    %v1012 = vlaneseq
    %v1013 = vshrl.u32 %v1012, 7
    %v1014 = vsub.s32 0, %v1013
    %v1015 = vrot.slane %v978, %v1014
    %v1016 = vadd.f32 %v1010, %v1015
    %v1017 = vadd.f32 %v1011, %v1015
    %v1018 = vld [vmem:[#allocation4 + $0xa0] sm:$0xff]
    %v1019 = vld [vmem:[#allocation4 + $0xa8] sm:$0xff]
    %v1020 = vld [vmem:[#allocation4 + $0xb0] sm:$0xff]
    %v1021 = vld [vmem:[#allocation4 + $0xb8] sm:$0xff]
    %v1022 = vld [vmem:[#allocation4 + $0x1a4] sm:$0x1]
    %v1023 = vlaneseq
    %v1024 = vshrl.u32 %v1023, 7
    %v1025 = vsub.s32 0, %v1024
    %v1026 = vrot.slane %v1022, %v1025
    %v1028 = vsel %vm144, %v1016, 0
    %v1031 = vsel %vm144, %v1017, 0
    %1033 = vmatprep.subr.mxu0 0.0
    %1034 = vmatpush1.msra.mxu0 %v1018
    %1035 = vmatprep.subr.mxu0 0.0
    %1036 = vmatpush1.msra.mxu0 %v1019
    %1037 = vmatprep.subr.mxu0 0.0
    %1038 = vmatpush1.msra.mxu0 %v1020
    %1039 = vmatprep.subr.mxu0 0.0
    %1040 = vmatpush1.msra.mxu0 %v1021
    %1041 = vmatprep.subr.mxu0 0.0
    %1042 = vmatpush1.msra.mxu0 0.0
    %1043 = vmatprep.subr.mxu0 0.0
    %1044 = vmatpush1.msra.mxu0 0.0
    %1045 = vmatprep.subr.mxu0 0.0
    %1046 = vmatpush1.msra.mxu0 0.0
    %1047 = vmatprep.subr.mxu0 0.0
    %1048 = vmatpush1.msra.mxu0 0.0
    %1049 = vmatprep.subr.mxu0 0.0
    %1050 = vmatpush1.msra.mxu0 0.0
    %1051 = vmatprep.subr.mxu0 0.0
    %1052 = vmatpush1.msra.mxu0 0.0
    %1053 = vmatprep.subr.mxu0 0.0
    %1054 = vmatpush1.msra.mxu0 0.0
    %1055 = vmatprep.subr.mxu0 0.0
    %1056 = vmatpush1.msra.mxu0 0.0
    %1057 = vmatprep.subr.mxu0 0.0
    %1058 = vmatpush1.msra.mxu0 0.0
    %1059 = vmatprep.subr.mxu0 0.0
    %1060 = vmatpush1.msra.mxu0 0.0
    %1061 = vmatprep.subr.mxu0 0.0
    %1062 = vmatpush1.msra.mxu0 0.0
    %1063 = vmatprep.subr.mxu0 0.0
    %1064 = vmatpush1.msra.mxu0 0.0
    %1065 = vmatprep.subr.mxu0 0.0
    %1066 = vmatpush1.msra.mxu0 0.0
    %1067 = vmatprep.subr.mxu0 0.0
    %1068 = vmatpush1.msra.mxu0 0.0
    %1069 = vmatprep.subr.mxu0 0.0
    %1070 = vmatpush1.msra.mxu0 0.0
    %1071 = vmatprep.subr.mxu0 0.0
    %1072 = vmatpush1.msra.mxu0 0.0
    %1073 = vmatprep.subr.mxu0 0.0
    %1074 = vmatpush1.msra.mxu0 0.0
    %1075 = vmatprep.subr.mxu0 0.0
    %1076 = vmatpush1.msra.mxu0 0.0
    %1077 = vmatprep.subr.mxu0 0.0
    %1078 = vmatpush1.msra.mxu0 0.0
    %1079 = vmatprep.subr.mxu0 0.0
    %1080 = vmatpush1.msra.mxu0 0.0
    %1081 = vmatprep.subr.mxu0 0.0
    %1082 = vmatpush1.msra.mxu0 0.0
    %1083 = vmatprep.subr.mxu0 0.0
    %1084 = vmatpush1.msra.mxu0 0.0
    %1085 = vmatprep.subr.mxu0 0.0
    %1086 = vmatpush1.msra.mxu0 0.0
    %1087 = vmatprep.subr.mxu0 0.0
    %1088 = vmatpush1.msra.mxu0 0.0
    %1089 = vmatprep.subr.mxu0 0.0
    %1090 = vmatpush1.msra.mxu0 0.0
    %1091 = vmatprep.subr.mxu0 0.0
    %1092 = vmatpush1.msra.mxu0 0.0
    %1093 = vmatprep.subr.mxu0 0.0
    %1094 = vmatpush1.msra.mxu0 0.0
    %1095 = vmatprep.subr.mxu0 0.0
    %1096 = vmatpush1.msra.mxu0 0.0
    %1097 = vmatprep.mubr.f32.mxu0 0.0
    %1098 = vmatmul.mubr.f32.gmra.mrb[0].mxu0 %v1028
    %v1099 = vpop.f32.mrb[0].mxu0
    %v1100 = vadd.f32 %v1026, %v1099
    %v1101 = vpop.f32.mrb[0].mxu0
    %1102 = vmatprep.mubr.f32.mxu0 0.0
    %1103 = vmatmul.mubr.f32.gmra.mrb[0].mxu0 %v1031
    %v1104 = vpop.f32.mrb[0].mxu0
    %v1105 = vadd.f32 %v1026, %v1104
    %v1106 = vpop.f32.mrb[0].mxu0
    %1107 = vdwg.mxu0
    %v1108 = vmax.f32 %v1100, 0.0
    %v1109 = vmax.f32 %v1105, 0.0
    %v1110 = vld [vmem:[#allocation4 + $0xc0] sm:$0xff]
    %v1111 = vld [vmem:[#allocation4 + $0xc8] sm:$0xff]
    %v1112 = vld [vmem:[#allocation4 + $0xd0] sm:$0xff]
    %v1113 = vld [vmem:[#allocation4 + $0xd8] sm:$0xff]
    %v1114 = vld [vmem:[#allocation4 + $0xe0] sm:$0xff]
    %v1115 = vld [vmem:[#allocation4 + $0xe8] sm:$0xff]
    %v1116 = vld [vmem:[#allocation4 + $0xf0] sm:$0xff]
    %v1117 = vld [vmem:[#allocation4 + $0xf8] sm:$0xff]
    %v1118 = vld [vmem:[#allocation4 + $0x1a5] sm:$0x1]
    %v1119 = vlaneseq
    %v1120 = vshrl.u32 %v1119, 7
    %v1121 = vsub.s32 0, %v1120
    %v1122 = vrot.slane %v1118, %v1121
    %v1124 = vsel %vm394, %v1108, 0
    %v1127 = vsel %vm394, %v1109, 0
    %1129 = vmatprep.subr.mxu0 0.0
    %1130 = vmatpush1.msra.mxu0 %v1110
    %1131 = vmatprep.subr.mxu0 0.0
    %1132 = vmatpush1.msra.mxu0 %v1111
    %1133 = vmatprep.subr.mxu0 0.0
    %1134 = vmatpush1.msra.mxu0 %v1112
    %1135 = vmatprep.subr.mxu0 0.0
    %1136 = vmatpush1.msra.mxu0 %v1113
    %1137 = vmatprep.subr.mxu0 0.0
    %1138 = vmatpush1.msra.mxu0 %v1114
    %1139 = vmatprep.subr.mxu0 0.0
    %1140 = vmatpush1.msra.mxu0 %v1115
    %1141 = vmatprep.subr.mxu0 0.0
    %1142 = vmatpush1.msra.mxu0 %v1116
    %1143 = vmatprep.subr.mxu0 0.0
    %1144 = vmatpush1.msra.mxu0 %v1117
    %1145 = vmatprep.subr.mxu0 0.0
    %1146 = vmatpush1.msra.mxu0 0.0
    %1147 = vmatprep.subr.mxu0 0.0
    %1148 = vmatpush1.msra.mxu0 0.0
    %1149 = vmatprep.subr.mxu0 0.0
    %1150 = vmatpush1.msra.mxu0 0.0
    %1151 = vmatprep.subr.mxu0 0.0
    %1152 = vmatpush1.msra.mxu0 0.0
    %1153 = vmatprep.subr.mxu0 0.0
    %1154 = vmatpush1.msra.mxu0 0.0
    %1155 = vmatprep.subr.mxu0 0.0
    %1156 = vmatpush1.msra.mxu0 0.0
    %1157 = vmatprep.subr.mxu0 0.0
    %1158 = vmatpush1.msra.mxu0 0.0
    %1159 = vmatprep.subr.mxu0 0.0
    %1160 = vmatpush1.msra.mxu0 0.0
    %1161 = vmatprep.subr.mxu0 0.0
    %1162 = vmatpush1.msra.mxu0 0.0
    %1163 = vmatprep.subr.mxu0 0.0
    %1164 = vmatpush1.msra.mxu0 0.0
    %1165 = vmatprep.subr.mxu0 0.0
    %1166 = vmatpush1.msra.mxu0 0.0
    %1167 = vmatprep.subr.mxu0 0.0
    %1168 = vmatpush1.msra.mxu0 0.0
    %1169 = vmatprep.subr.mxu0 0.0
    %1170 = vmatpush1.msra.mxu0 0.0
    %1171 = vmatprep.subr.mxu0 0.0
    %1172 = vmatpush1.msra.mxu0 0.0
    %1173 = vmatprep.subr.mxu0 0.0
    %1174 = vmatpush1.msra.mxu0 0.0
    %1175 = vmatprep.subr.mxu0 0.0
    %1176 = vmatpush1.msra.mxu0 0.0
    %1177 = vmatprep.subr.mxu0 0.0
    %1178 = vmatpush1.msra.mxu0 0.0
    %1179 = vmatprep.subr.mxu0 0.0
    %1180 = vmatpush1.msra.mxu0 0.0
    %1181 = vmatprep.subr.mxu0 0.0
    %1182 = vmatpush1.msra.mxu0 0.0
    %1183 = vmatprep.subr.mxu0 0.0
    %1184 = vmatpush1.msra.mxu0 0.0
    %1185 = vmatprep.subr.mxu0 0.0
    %1186 = vmatpush1.msra.mxu0 0.0
    %1187 = vmatprep.subr.mxu0 0.0
    %1188 = vmatpush1.msra.mxu0 0.0
    %1189 = vmatprep.subr.mxu0 0.0
    %1190 = vmatpush1.msra.mxu0 0.0
    %1191 = vmatprep.subr.mxu0 0.0
    %1192 = vmatpush1.msra.mxu0 0.0
    %1193 = vmatprep.mubr.f32.mxu0 0.0
    %1194 = vmatmul.mubr.f32.gmra.mrb[0].mxu0 %v1124
    %v1195 = vpop.f32.mrb[0].mxu0
    %v1196 = vadd.f32 %v1122, %v1195
    %v1197 = vpop.f32.mrb[0].mxu0
    %1198 = vmatprep.mubr.f32.mxu0 0.0
    %1199 = vmatmul.mubr.f32.gmra.mrb[0].mxu0 %v1127
    %v1200 = vpop.f32.mrb[0].mxu0
    %v1201 = vadd.f32 %v1122, %v1200
    %v1202 = vpop.f32.mrb[0].mxu0
    %1203 = vdwg.mxu0
    %v1204 = vadd.f32 %v1016, %v1196
    %v1205 = vadd.f32 %v1017, %v1201
    %v1206 = vld [vmem:[#allocation4 + $0x1a6] sm:$0x1]
    %v1207 = vld [vmem:[#allocation4 + $0x1a7] sm:$0x1]
    %v1208 = vsel %vm144, %v1204, 0.0
    %1209 = vadd.xlane.f32.xlu0 %v1208
    %v1210 = vpop.xlane.xlu0 %1209
    %v1211 = vsel %vm144, %v1205, 0.0
    %1212 = vadd.xlane.f32.xlu0 %v1211
    %v1213 = vpop.xlane.xlu0 %1212
    %v1214 = vmul.f32 %v1210, %v985
    %v1215 = vmul.f32 %v1213, %v985
    %v1216 = vsub.f32 %v1204, %v1214
    %v1217 = vsub.f32 %v1205, %v1215
    %v1218 = vmul.f32 %v1216, %v1216
    %v1219 = vmul.f32 %v1217, %v1217
    %v1220 = vsel %vm144, %v1218, 0.0
    %1221 = vadd.xlane.f32.xlu0 %v1220
    %v1222 = vpop.xlane.xlu0 %1221
    %v1223 = vsel %vm144, %v1219, 0.0
    %1224 = vadd.xlane.f32.xlu0 %v1223
    %v1225 = vpop.xlane.xlu0 %1224
    %v1226 = vmul.f32 %v1222, %v985
    %v1227 = vmul.f32 %v1225, %v985
    %v1228 = vadd.f32 %v1226, 1e-05
    %v1229 = vadd.f32 %v1227, 1e-05
    %v1230 = vrsqrt.pop %v1228
    %v1231 = vrsqrt.pop %v1229
    %v1232 = vmul.f32 %v1216, %v1230
    %v1233 = vmul.f32 %v1217, %v1231
    %v1234 = vlaneseq
    %v1235 = vshrl.u32 %v1234, 7
    %v1236 = vsub.s32 0, %v1235
    %v1237 = vrot.slane %v1206, %v1236
    %v1238 = vmul.f32 %v1232, %v1237
    %v1239 = vmul.f32 %v1233, %v1237
    %v1240 = vlaneseq
    %v1241 = vshrl.u32 %v1240, 7
    %v1242 = vsub.s32 0, %v1241
    %v1243 = vrot.slane %v1207, %v1242
    %v1244 = vadd.f32 %v1238, %v1243
    %v1245 = vadd.f32 %v1239, %v1243
    %v1246 = vld [vmem:[#allocation4 + $0x100] sm:$0xff]
    %v1247 = vld [vmem:[#allocation4 + $0x108] sm:$0xff]
    %v1248 = vld [vmem:[#allocation4 + $0x110] sm:$0xff]
    %v1249 = vld [vmem:[#allocation4 + $0x118] sm:$0xff]
    %v1250 = vld [vmem:[#allocation4 + $0x1a8] sm:$0x1]
    %v1251 = vlaneseq
    %v1252 = vshrl.u32 %v1251, 7
    %v1253 = vsub.s32 0, %v1252
    %v1254 = vrot.slane %v1250, %v1253
    %v1256 = vsel %vm144, %v1244, 0
    %v1259 = vsel %vm144, %v1245, 0
    %1261 = vmatprep.subr.mxu0 0.0
    %1262 = vmatpush1.msra.mxu0 %v1246
    %1263 = vmatprep.subr.mxu0 0.0
    %1264 = vmatpush1.msra.mxu0 %v1247
    %1265 = vmatprep.subr.mxu0 0.0
    %1266 = vmatpush1.msra.mxu0 %v1248
    %1267 = vmatprep.subr.mxu0 0.0
    %1268 = vmatpush1.msra.mxu0 %v1249
    %1269 = vmatprep.subr.mxu0 0.0
    %1270 = vmatpush1.msra.mxu0 0.0
    %1271 = vmatprep.subr.mxu0 0.0
    %1272 = vmatpush1.msra.mxu0 0.0
    %1273 = vmatprep.subr.mxu0 0.0
    %1274 = vmatpush1.msra.mxu0 0.0
    %1275 = vmatprep.subr.mxu0 0.0
    %1276 = vmatpush1.msra.mxu0 0.0
    %1277 = vmatprep.subr.mxu0 0.0
    %1278 = vmatpush1.msra.mxu0 0.0
    %1279 = vmatprep.subr.mxu0 0.0
    %1280 = vmatpush1.msra.mxu0 0.0
    %1281 = vmatprep.subr.mxu0 0.0
    %1282 = vmatpush1.msra.mxu0 0.0
    %1283 = vmatprep.subr.mxu0 0.0
    %1284 = vmatpush1.msra.mxu0 0.0
    %1285 = vmatprep.subr.mxu0 0.0
    %1286 = vmatpush1.msra.mxu0 0.0
    %1287 = vmatprep.subr.mxu0 0.0
    %1288 = vmatpush1.msra.mxu0 0.0
    %1289 = vmatprep.subr.mxu0 0.0
    %1290 = vmatpush1.msra.mxu0 0.0
    %1291 = vmatprep.subr.mxu0 0.0
    %1292 = vmatpush1.msra.mxu0 0.0
    %1293 = vmatprep.subr.mxu0 0.0
    %1294 = vmatpush1.msra.mxu0 0.0
    %1295 = vmatprep.subr.mxu0 0.0
    %1296 = vmatpush1.msra.mxu0 0.0
    %1297 = vmatprep.subr.mxu0 0.0
    %1298 = vmatpush1.msra.mxu0 0.0
    %1299 = vmatprep.subr.mxu0 0.0
    %1300 = vmatpush1.msra.mxu0 0.0
    %1301 = vmatprep.subr.mxu0 0.0
    %1302 = vmatpush1.msra.mxu0 0.0
    %1303 = vmatprep.subr.mxu0 0.0
    %1304 = vmatpush1.msra.mxu0 0.0
    %1305 = vmatprep.subr.mxu0 0.0
    %1306 = vmatpush1.msra.mxu0 0.0
    %1307 = vmatprep.subr.mxu0 0.0
    %1308 = vmatpush1.msra.mxu0 0.0
    %1309 = vmatprep.subr.mxu0 0.0
    %1310 = vmatpush1.msra.mxu0 0.0
    %1311 = vmatprep.subr.mxu0 0.0
    %1312 = vmatpush1.msra.mxu0 0.0
    %1313 = vmatprep.subr.mxu0 0.0
    %1314 = vmatpush1.msra.mxu0 0.0
    %1315 = vmatprep.subr.mxu0 0.0
    %1316 = vmatpush1.msra.mxu0 0.0
    %1317 = vmatprep.subr.mxu0 0.0
    %1318 = vmatpush1.msra.mxu0 0.0
    %1319 = vmatprep.subr.mxu0 0.0
    %1320 = vmatpush1.msra.mxu0 0.0
    %1321 = vmatprep.subr.mxu0 0.0
    %1322 = vmatpush1.msra.mxu0 0.0
    %1323 = vmatprep.subr.mxu0 0.0
    %1324 = vmatpush1.msra.mxu0 0.0
    %1325 = vmatprep.mubr.f32.mxu0 0.0
    %1326 = vmatmul.mubr.f32.gmra.mrb[0].mxu0 %v1256
    %v1327 = vpop.f32.mrb[0].mxu0
    %v1328 = vadd.f32 %v1254, %v1327
    %v1329 = vpop.f32.mrb[0].mxu0
    %1330 = vmatprep.mubr.f32.mxu0 0.0
    %1331 = vmatmul.mubr.f32.gmra.mrb[0].mxu0 %v1259
    %v1332 = vpop.f32.mrb[0].mxu0
    %v1333 = vadd.f32 %v1254, %v1332
    %v1334 = vpop.f32.mrb[0].mxu0
    %1335 = vdwg.mxu0
    %1338 = vrot.lane.b32.xlu0 %v1328, 120
    %v1339 = vpop.permute.xlu0 %1338
    %1340 = vrot.lane.b32.xlu0 %v1333, 120
    %v1341 = vpop.permute.xlu0 %1340
    %1342 = vrot.lane.b32.xlu0 %v1328, 112
    %v1343 = vpop.permute.xlu0 %1342
    %1344 = vrot.lane.b32.xlu0 %v1333, 112
    %v1345 = vpop.permute.xlu0 %1344
    %1346 = vrot.lane.b32.xlu0 %v1328, 104
    %v1347 = vpop.permute.xlu0 %1346
    %1348 = vrot.lane.b32.xlu0 %v1333, 104
    %v1349 = vpop.permute.xlu0 %1348
    %1350 = vrot.lane.b32.xlu0 %v1328, 96
    %v1351 = vpop.permute.xlu0 %1350
    %1352 = vrot.lane.b32.xlu0 %v1333, 96
    %v1353 = vpop.permute.xlu0 %1352
    %1354 = vrot.lane.b32.xlu0 %v1339, 96
    %v1355 = vpop.permute.xlu0 %1354
    %1356 = vrot.lane.b32.xlu0 %v1341, 96
    %v1357 = vpop.permute.xlu0 %1356
    %1358 = vrot.lane.b32.xlu0 %v1343, 96
    %v1359 = vpop.permute.xlu0 %1358
    %1360 = vrot.lane.b32.xlu0 %v1345, 96
    %v1361 = vpop.permute.xlu0 %1360
    %1362 = vrot.lane.b32.xlu0 %v1347, 96
    %v1363 = vpop.permute.xlu0 %1362
    %1364 = vrot.lane.b32.xlu0 %v1349, 96
    %v1365 = vpop.permute.xlu0 %1364
    %v1366 = vsel %vm256, %v1328, 0
    %v1368 = vsel %vm256, %v1333, 0
    %v1370 = vsel %vm256, %v1339, 0
    %v1372 = vsel %vm256, %v1341, 0
    %v1374 = vsel %vm256, %v1343, 0
    %v1376 = vsel %vm256, %v1345, 0
    %v1378 = vsel %vm256, %v1347, 0
    %v1380 = vsel %vm256, %v1349, 0
    %v1382 = vsel %vm256, %v1351, 0
    %v1384 = vsel %vm256, %v1353, 0
    %v1386 = vsel %vm256, %v1355, 0
    %v1388 = vsel %vm256, %v1357, 0
    %v1390 = vsel %vm256, %v1359, 0
    %v1392 = vsel %vm256, %v1361, 0
    %v1394 = vsel %vm256, %v1363, 0
    %v1396 = vsel %vm256, %v1365, 0
    %1398 = vmatprep.subr.mxu0 0.0
    %1399 = vmatpush1.xpose.msra.mxu0 %v1382
    %1400 = vmatprep.subr.mxu0 0.0
    %1401 = vmatpush1.xpose.msra.mxu0 %v1384
    %1402 = vmatprep.subr.mxu0 0.0
    %1403 = vmatpush1.xpose.msra.mxu0 %v1386
    %1404 = vmatprep.subr.mxu0 0.0
    %1405 = vmatpush1.xpose.msra.mxu0 %v1388
    %1406 = vmatprep.subr.mxu0 0.0
    %1407 = vmatpush1.xpose.msra.mxu0 %v1390
    %1408 = vmatprep.subr.mxu0 0.0
    %1409 = vmatpush1.xpose.msra.mxu0 %v1392
    %1410 = vmatprep.subr.mxu0 0.0
    %1411 = vmatpush1.xpose.msra.mxu0 %v1394
    %1412 = vmatprep.subr.mxu0 0.0
    %1413 = vmatpush1.xpose.msra.mxu0 %v1396
    %1414 = vmatprep.subr.mxu0 0.0
    %1415 = vmatpush1.xpose.msra.mxu0 0.0
    %1416 = vmatprep.subr.mxu0 0.0
    %1417 = vmatpush1.xpose.msra.mxu0 0.0
    %1418 = vmatprep.subr.mxu0 0.0
    %1419 = vmatpush1.xpose.msra.mxu0 0.0
    %1420 = vmatprep.subr.mxu0 0.0
    %1421 = vmatpush1.xpose.msra.mxu0 0.0
    %1422 = vmatprep.subr.mxu0 0.0
    %1423 = vmatpush1.xpose.msra.mxu0 0.0
    %1424 = vmatprep.subr.mxu0 0.0
    %1425 = vmatpush1.xpose.msra.mxu0 0.0
    %1426 = vmatprep.subr.mxu0 0.0
    %1427 = vmatpush1.xpose.msra.mxu0 0.0
    %1428 = vmatprep.subr.mxu0 0.0
    %1429 = vmatpush1.xpose.msra.mxu0 0.0
    %1430 = vmatprep.subr.mxu0 0.0
    %1431 = vmatpush1.xpose.msra.mxu0 0.0
    %1432 = vmatprep.subr.mxu0 0.0
    %1433 = vmatpush1.xpose.msra.mxu0 0.0
    %1434 = vmatprep.subr.mxu0 0.0
    %1435 = vmatpush1.xpose.msra.mxu0 0.0
    %1436 = vmatprep.subr.mxu0 0.0
    %1437 = vmatpush1.xpose.msra.mxu0 0.0
    %1438 = vmatprep.subr.mxu0 0.0
    %1439 = vmatpush1.xpose.msra.mxu0 0.0
    %1440 = vmatprep.subr.mxu0 0.0
    %1441 = vmatpush1.xpose.msra.mxu0 0.0
    %1442 = vmatprep.subr.mxu0 0.0
    %1443 = vmatpush1.xpose.msra.mxu0 0.0
    %1444 = vmatprep.subr.mxu0 0.0
    %1445 = vmatpush1.xpose.msra.mxu0 0.0
    %1446 = vmatprep.subr.mxu0 0.0
    %1447 = vmatpush1.xpose.msra.mxu0 0.0
    %1448 = vmatprep.subr.mxu0 0.0
    %1449 = vmatpush1.xpose.msra.mxu0 0.0
    %1450 = vmatprep.subr.mxu0 0.0
    %1451 = vmatpush1.xpose.msra.mxu0 0.0
    %1452 = vmatprep.subr.mxu0 0.0
    %1453 = vmatpush1.xpose.msra.mxu0 0.0
    %1454 = vmatprep.subr.mxu0 0.0
    %1455 = vmatpush1.xpose.msra.mxu0 0.0
    %1456 = vmatprep.subr.mxu0 0.0
    %1457 = vmatpush1.xpose.msra.mxu0 0.0
    %1458 = vmatprep.subr.mxu0 0.0
    %1459 = vmatpush1.xpose.msra.mxu0 0.0
    %1460 = vmatprep.subr.mxu0 0.0
    %1461 = vmatpush1.xpose.msra.mxu0 0.0
    %1462 = vmatprep.mubr.f32.mxu0 0.0
    %1463 = vmatmul.mubr.f32.gmra.mrb[0].mxu0 %v1366
    %v1464 = vpop.f32.mrb[0].mxu0
    %v1465 = vadd.f32 %v127, %v1464
    %v1466 = vpop.f32.mrb[0].mxu0
    %1467 = vmatprep.mubr.f32.mxu0 0.0
    %1468 = vmatmul.mubr.f32.gmra.mrb[0].mxu0 %v1368
    %v1469 = vpop.f32.mrb[0].mxu0
    %v1470 = vadd.f32 %v128, %v1469
    %v1471 = vpop.f32.mrb[0].mxu0
    %1472 = vmatprep.mubr.f32.mxu0 0.0
    %1473 = vmatmul.mubr.f32.gmra.mrb[0].mxu0 %v1370
    %v1474 = vpop.f32.mrb[0].mxu0
    %v1475 = vadd.f32 %v129, %v1474
    %v1476 = vpop.f32.mrb[0].mxu0
    %1477 = vmatprep.mubr.f32.mxu0 0.0
    %1478 = vmatmul.mubr.f32.gmra.mrb[0].mxu0 %v1372
    %v1479 = vpop.f32.mrb[0].mxu0
    %v1480 = vadd.f32 %v130, %v1479
    %v1481 = vpop.f32.mrb[0].mxu0
    %1482 = vmatprep.mubr.f32.mxu0 0.0
    %1483 = vmatmul.mubr.f32.gmra.mrb[0].mxu0 %v1374
    %v1484 = vpop.f32.mrb[0].mxu0
    %v1485 = vadd.f32 %v131, %v1484
    %v1486 = vpop.f32.mrb[0].mxu0
    %1487 = vmatprep.mubr.f32.mxu0 0.0
    %1488 = vmatmul.mubr.f32.gmra.mrb[0].mxu0 %v1376
    %v1489 = vpop.f32.mrb[0].mxu0
    %v1490 = vadd.f32 %v132, %v1489
    %v1491 = vpop.f32.mrb[0].mxu0
    %1492 = vmatprep.mubr.f32.mxu0 0.0
    %1493 = vmatmul.mubr.f32.gmra.mrb[0].mxu0 %v1378
    %v1494 = vpop.f32.mrb[0].mxu0
    %v1495 = vadd.f32 %v133, %v1494
    %v1496 = vpop.f32.mrb[0].mxu0
    %1497 = vmatprep.mubr.f32.mxu0 0.0
    %1498 = vmatmul.mubr.f32.gmra.mrb[0].mxu0 %v1380
    %v1499 = vpop.f32.mrb[0].mxu0
    %v1500 = vadd.f32 %v134, %v1499
    %v1501 = vpop.f32.mrb[0].mxu0
    %1502 = vdwg.mxu0
    %v1503 = vsel %vm394, %v1465, -inf
    %1504 = vmax.xlane.f32.xlu0 %v1503
    %v1505 = vpop.xlane.xlu0 %1504
    %v1506 = vsel %vm394, %v1470, -inf
    %1507 = vmax.xlane.f32.xlu0 %v1506
    %v1508 = vpop.xlane.xlu0 %1507
    %v1509 = vsel %vm394, %v1475, -inf
    %1510 = vmax.xlane.f32.xlu0 %v1509
    %v1511 = vpop.xlane.xlu0 %1510
    %v1512 = vsel %vm394, %v1480, -inf
    %1513 = vmax.xlane.f32.xlu0 %v1512
    %v1514 = vpop.xlane.xlu0 %1513
    %v1515 = vsel %vm394, %v1485, -inf
    %1516 = vmax.xlane.f32.xlu0 %v1515
    %v1517 = vpop.xlane.xlu0 %1516
    %v1518 = vsel %vm394, %v1490, -inf
    %1519 = vmax.xlane.f32.xlu0 %v1518
    %v1520 = vpop.xlane.xlu0 %1519
    %v1521 = vsel %vm394, %v1495, -inf
    %1522 = vmax.xlane.f32.xlu0 %v1521
    %v1523 = vpop.xlane.xlu0 %1522
    %v1524 = vsel %vm394, %v1500, -inf
    %1525 = vmax.xlane.f32.xlu0 %v1524
    %v1526 = vpop.xlane.xlu0 %1525
    %v1527 = vsub.f32 %v1465, %v1505
    %v1528 = vsub.f32 %v1470, %v1508
    %v1529 = vsub.f32 %v1475, %v1511
    %v1530 = vsub.f32 %v1480, %v1514
    %v1531 = vsub.f32 %v1485, %v1517
    %v1532 = vsub.f32 %v1490, %v1520
    %v1533 = vsub.f32 %v1495, %v1523
    %v1534 = vsub.f32 %v1500, %v1526
    %v1535 = vmul.f32 %v1527, 1.442695
    %v1536 = vpow.pop %v1535
    %v1537 = vmul.f32 %v1528, 1.442695
    %v1538 = vpow.pop %v1537
    %v1539 = vmul.f32 %v1529, 1.442695
    %v1540 = vpow.pop %v1539
    %v1541 = vmul.f32 %v1530, 1.442695
    %v1542 = vpow.pop %v1541
    %v1543 = vmul.f32 %v1531, 1.442695
    %v1544 = vpow.pop %v1543
    %v1545 = vmul.f32 %v1532, 1.442695
    %v1546 = vpow.pop %v1545
    %v1547 = vmul.f32 %v1533, 1.442695
    %v1548 = vpow.pop %v1547
    %v1549 = vmul.f32 %v1534, 1.442695
    %v1550 = vpow.pop %v1549
    %v1551 = vsel %vm394, %v1536, 0.0
    %1552 = vadd.xlane.f32.xlu0 %v1551
    %v1553 = vpop.xlane.xlu0 %1552
    %v1554 = vsel %vm394, %v1538, 0.0
    %1555 = vadd.xlane.f32.xlu0 %v1554
    %v1556 = vpop.xlane.xlu0 %1555
    %v1557 = vsel %vm394, %v1540, 0.0
    %1558 = vadd.xlane.f32.xlu0 %v1557
    %v1559 = vpop.xlane.xlu0 %1558
    %v1560 = vsel %vm394, %v1542, 0.0
    %1561 = vadd.xlane.f32.xlu0 %v1560
    %v1562 = vpop.xlane.xlu0 %1561
    %v1563 = vsel %vm394, %v1544, 0.0
    %1564 = vadd.xlane.f32.xlu0 %v1563
    %v1565 = vpop.xlane.xlu0 %1564
    %v1566 = vsel %vm394, %v1546, 0.0
    %1567 = vadd.xlane.f32.xlu0 %v1566
    %v1568 = vpop.xlane.xlu0 %1567
    %v1569 = vsel %vm394, %v1548, 0.0
    %1570 = vadd.xlane.f32.xlu0 %v1569
    %v1571 = vpop.xlane.xlu0 %1570
    %v1572 = vsel %vm394, %v1550, 0.0
    %1573 = vadd.xlane.f32.xlu0 %v1572
    %v1574 = vpop.xlane.xlu0 %1573
    %v1575 = vrcp.pop %v1553
    %v1576 = vrcp.pop %v1556
    %v1577 = vrcp.pop %v1559
    %v1578 = vrcp.pop %v1562
    %v1579 = vrcp.pop %v1565
    %v1580 = vrcp.pop %v1568
    %v1581 = vrcp.pop %v1571
    %v1582 = vrcp.pop %v1574
    %v1583 = vmul.f32 %v1536, %v1575
    %v1584 = vmul.f32 %v1538, %v1576
    %v1585 = vmul.f32 %v1540, %v1577
    %v1586 = vmul.f32 %v1542, %v1578
    %v1587 = vmul.f32 %v1544, %v1579
    %v1588 = vmul.f32 %v1546, %v1580
    %v1589 = vmul.f32 %v1548, %v1581
    %v1590 = vmul.f32 %v1550, %v1582
    %1591 = vrot.lane.b32.xlu0 %v1328, 64
    %v1592 = vpop.permute.xlu0 %1591
    %1593 = vrot.lane.b32.xlu0 %v1333, 64
    %v1594 = vpop.permute.xlu0 %1593
    %1595 = vrot.lane.b32.xlu0 %v1339, 64
    %v1596 = vpop.permute.xlu0 %1595
    %1597 = vrot.lane.b32.xlu0 %v1341, 64
    %v1598 = vpop.permute.xlu0 %1597
    %1599 = vrot.lane.b32.xlu0 %v1343, 64
    %v1600 = vpop.permute.xlu0 %1599
    %1601 = vrot.lane.b32.xlu0 %v1345, 64
    %v1602 = vpop.permute.xlu0 %1601
    %1603 = vrot.lane.b32.xlu0 %v1347, 64
    %v1604 = vpop.permute.xlu0 %1603
    %1605 = vrot.lane.b32.xlu0 %v1349, 64
    %v1606 = vpop.permute.xlu0 %1605
    %v1616 = vsel %vm394, %v1583, 0
    %v1619 = vsel %vm394, %v1584, 0
    %v1622 = vsel %vm394, %v1585, 0
    %v1625 = vsel %vm394, %v1586, 0
    %v1628 = vsel %vm394, %v1587, 0
    %v1631 = vsel %vm394, %v1588, 0
    %v1634 = vsel %vm394, %v1589, 0
    %v1637 = vsel %vm394, %v1590, 0
    %1639 = vmatprep.subr.mxu0 0.0
    %1640 = vmatpush1.msra.mxu0 %v1592
    %1641 = vmatprep.subr.mxu0 0.0
    %1642 = vmatpush1.msra.mxu0 %v1594
    %1643 = vmatprep.subr.mxu0 0.0
    %1644 = vmatpush1.msra.mxu0 %v1596
    %1645 = vmatprep.subr.mxu0 0.0
    %1646 = vmatpush1.msra.mxu0 %v1598
    %1647 = vmatprep.subr.mxu0 0.0
    %1648 = vmatpush1.msra.mxu0 %v1600
    %1649 = vmatprep.subr.mxu0 0.0
    %1650 = vmatpush1.msra.mxu0 %v1602
    %1651 = vmatprep.subr.mxu0 0.0
    %1652 = vmatpush1.msra.mxu0 %v1604
    %1653 = vmatprep.subr.mxu0 0.0
    %1654 = vmatpush1.msra.mxu0 %v1606
    %1655 = vmatprep.subr.mxu0 0.0
    %1656 = vmatpush1.msra.mxu0 0.0
    %1657 = vmatprep.subr.mxu0 0.0
    %1658 = vmatpush1.msra.mxu0 0.0
    %1659 = vmatprep.subr.mxu0 0.0
    %1660 = vmatpush1.msra.mxu0 0.0
    %1661 = vmatprep.subr.mxu0 0.0
    %1662 = vmatpush1.msra.mxu0 0.0
    %1663 = vmatprep.subr.mxu0 0.0
    %1664 = vmatpush1.msra.mxu0 0.0
    %1665 = vmatprep.subr.mxu0 0.0
    %1666 = vmatpush1.msra.mxu0 0.0
    %1667 = vmatprep.subr.mxu0 0.0
    %1668 = vmatpush1.msra.mxu0 0.0
    %1669 = vmatprep.subr.mxu0 0.0
    %1670 = vmatpush1.msra.mxu0 0.0
    %1671 = vmatprep.subr.mxu0 0.0
    %1672 = vmatpush1.msra.mxu0 0.0
    %1673 = vmatprep.subr.mxu0 0.0
    %1674 = vmatpush1.msra.mxu0 0.0
    %1675 = vmatprep.subr.mxu0 0.0
    %1676 = vmatpush1.msra.mxu0 0.0
    %1677 = vmatprep.subr.mxu0 0.0
    %1678 = vmatpush1.msra.mxu0 0.0
    %1679 = vmatprep.subr.mxu0 0.0
    %1680 = vmatpush1.msra.mxu0 0.0
    %1681 = vmatprep.subr.mxu0 0.0
    %1682 = vmatpush1.msra.mxu0 0.0
    %1683 = vmatprep.subr.mxu0 0.0
    %1684 = vmatpush1.msra.mxu0 0.0
    %1685 = vmatprep.subr.mxu0 0.0
    %1686 = vmatpush1.msra.mxu0 0.0
    %1687 = vmatprep.subr.mxu0 0.0
    %1688 = vmatpush1.msra.mxu0 0.0
    %1689 = vmatprep.subr.mxu0 0.0
    %1690 = vmatpush1.msra.mxu0 0.0
    %1691 = vmatprep.subr.mxu0 0.0
    %1692 = vmatpush1.msra.mxu0 0.0
    %1693 = vmatprep.subr.mxu0 0.0
    %1694 = vmatpush1.msra.mxu0 0.0
    %1695 = vmatprep.subr.mxu0 0.0
    %1696 = vmatpush1.msra.mxu0 0.0
    %1697 = vmatprep.subr.mxu0 0.0
    %1698 = vmatpush1.msra.mxu0 0.0
    %1699 = vmatprep.subr.mxu0 0.0
    %1700 = vmatpush1.msra.mxu0 0.0
    %1701 = vmatprep.subr.mxu0 0.0
    %1702 = vmatpush1.msra.mxu0 0.0
    %1703 = vmatprep.mubr.f32.mxu0 0.0
    %1704 = vmatmul.mubr.f32.gmra.mrb[0].mxu0 %v1616
    %v1705 = vpop.f32.mrb[0].mxu0
    %v1706 = vadd.f32 0.0, %v1705
    %v1707 = vpop.f32.mrb[0].mxu0
    %1708 = vmatprep.mubr.f32.mxu0 0.0
    %1709 = vmatmul.mubr.f32.gmra.mrb[0].mxu0 %v1619
    %v1710 = vpop.f32.mrb[0].mxu0
    %v1711 = vadd.f32 0.0, %v1710
    %v1712 = vpop.f32.mrb[0].mxu0
    %1713 = vmatprep.mubr.f32.mxu0 0.0
    %1714 = vmatmul.mubr.f32.gmra.mrb[0].mxu0 %v1622
    %v1715 = vpop.f32.mrb[0].mxu0
    %v1716 = vadd.f32 0.0, %v1715
    %v1717 = vpop.f32.mrb[0].mxu0
    %1718 = vmatprep.mubr.f32.mxu0 0.0
    %1719 = vmatmul.mubr.f32.gmra.mrb[0].mxu0 %v1625
    %v1720 = vpop.f32.mrb[0].mxu0
    %v1721 = vadd.f32 0.0, %v1720
    %v1722 = vpop.f32.mrb[0].mxu0
    %1723 = vmatprep.mubr.f32.mxu0 0.0
    %1724 = vmatmul.mubr.f32.gmra.mrb[0].mxu0 %v1628
    %v1725 = vpop.f32.mrb[0].mxu0
    %v1726 = vadd.f32 0.0, %v1725
    %v1727 = vpop.f32.mrb[0].mxu0
    %1728 = vmatprep.mubr.f32.mxu0 0.0
    %1729 = vmatmul.mubr.f32.gmra.mrb[0].mxu0 %v1631
    %v1730 = vpop.f32.mrb[0].mxu0
    %v1731 = vadd.f32 0.0, %v1730
    %v1732 = vpop.f32.mrb[0].mxu0
    %1733 = vmatprep.mubr.f32.mxu0 0.0
    %1734 = vmatmul.mubr.f32.gmra.mrb[0].mxu0 %v1634
    %v1735 = vpop.f32.mrb[0].mxu0
    %v1736 = vadd.f32 0.0, %v1735
    %v1737 = vpop.f32.mrb[0].mxu0
    %1738 = vmatprep.mubr.f32.mxu0 0.0
    %1739 = vmatmul.mubr.f32.gmra.mrb[0].mxu0 %v1637
    %v1740 = vpop.f32.mrb[0].mxu0
    %v1741 = vadd.f32 0.0, %v1740
    %v1742 = vpop.f32.mrb[0].mxu0
    %1743 = vdwg.mxu0
    %v1744 = vld [vmem:[#allocation4 + $0x120] sm:$0xff]
    %v1745 = vld [vmem:[#allocation4 + $0x128] sm:$0xff]
    %v1747 = vsel %vm256, %v1716, 0
    %v1750 = vsel %vm256, %v1721, 0
    %1752 = vmatprep.subr.mxu0 0.0
    %1753 = vmatpush1.msra.mxu0 %v1745
    %1754 = vmatprep.subr.mxu0 0.0
    %1755 = vmatpush1.msra.mxu0 0.0
    %1756 = vmatprep.subr.mxu0 0.0
    %1757 = vmatpush1.msra.mxu0 0.0
    %1758 = vmatprep.subr.mxu0 0.0
    %1759 = vmatpush1.msra.mxu0 0.0
    %1760 = vmatprep.subr.mxu0 0.0
    %1761 = vmatpush1.msra.mxu0 0.0
    %1762 = vmatprep.subr.mxu0 0.0
    %1763 = vmatpush1.msra.mxu0 0.0
    %1764 = vmatprep.subr.mxu0 0.0
    %1765 = vmatpush1.msra.mxu0 0.0
    %1766 = vmatprep.subr.mxu0 0.0
    %1767 = vmatpush1.msra.mxu0 0.0
    %1768 = vmatprep.subr.mxu0 0.0
    %1769 = vmatpush1.msra.mxu0 0.0
    %1770 = vmatprep.subr.mxu0 0.0
    %1771 = vmatpush1.msra.mxu0 0.0
    %1772 = vmatprep.subr.mxu0 0.0
    %1773 = vmatpush1.msra.mxu0 0.0
    %1774 = vmatprep.subr.mxu0 0.0
    %1775 = vmatpush1.msra.mxu0 0.0
    %1776 = vmatprep.subr.mxu0 0.0
    %1777 = vmatpush1.msra.mxu0 0.0
    %1778 = vmatprep.subr.mxu0 0.0
    %1779 = vmatpush1.msra.mxu0 0.0
    %1780 = vmatprep.subr.mxu0 0.0
    %1781 = vmatpush1.msra.mxu0 0.0
    %1782 = vmatprep.subr.mxu0 0.0
    %1783 = vmatpush1.msra.mxu0 0.0
    %1784 = vmatprep.subr.mxu0 0.0
    %1785 = vmatpush1.msra.mxu0 0.0
    %1786 = vmatprep.subr.mxu0 0.0
    %1787 = vmatpush1.msra.mxu0 0.0
    %1788 = vmatprep.subr.mxu0 0.0
    %1789 = vmatpush1.msra.mxu0 0.0
    %1790 = vmatprep.subr.mxu0 0.0
    %1791 = vmatpush1.msra.mxu0 0.0
    %1792 = vmatprep.subr.mxu0 0.0
    %1793 = vmatpush1.msra.mxu0 0.0
    %1794 = vmatprep.subr.mxu0 0.0
    %1795 = vmatpush1.msra.mxu0 0.0
    %1796 = vmatprep.subr.mxu0 0.0
    %1797 = vmatpush1.msra.mxu0 0.0
    %1798 = vmatprep.subr.mxu0 0.0
    %1799 = vmatpush1.msra.mxu0 0.0
    %1800 = vmatprep.subr.mxu0 0.0
    %1801 = vmatpush1.msra.mxu0 0.0
    %1802 = vmatprep.subr.mxu0 0.0
    %1803 = vmatpush1.msra.mxu0 0.0
    %1804 = vmatprep.subr.mxu0 0.0
    %1805 = vmatpush1.msra.mxu0 0.0
    %1806 = vmatprep.subr.mxu0 0.0
    %1807 = vmatpush1.msra.mxu0 0.0
    %1808 = vmatprep.subr.mxu0 0.0
    %1809 = vmatpush1.msra.mxu0 0.0
    %1810 = vmatprep.subr.mxu0 0.0
    %1811 = vmatpush1.msra.mxu0 0.0
    %1812 = vmatprep.subr.mxu0 0.0
    %1813 = vmatpush1.msra.mxu0 0.0
    %1814 = vmatprep.subr.mxu0 0.0
    %1815 = vmatpush1.msra.mxu0 0.0
    %1816 = vmatprep.mubr.f32.mxu0 0.0
    %1817 = vmatmul.mubr.f32.gmra.mrb[0].mxu0 %v1747
    %v1818 = vpop.f32.mrb[0].mxu0
    %v1819 = vadd.f32 0.0, %v1818
    %v1820 = vpop.f32.mrb[0].mxu0
    %1821 = vmatprep.mubr.f32.mxu0 0.0
    %1822 = vmatmul.mubr.f32.gmra.mrb[0].mxu0 %v1750
    %v1823 = vpop.f32.mrb[0].mxu0
    %v1824 = vadd.f32 0.0, %v1823
    %v1825 = vpop.f32.mrb[0].mxu0
    %1826 = vdwg.mxu0
    %v1828 = vsel %vm256, %v1706, 0
    %v1831 = vsel %vm256, %v1711, 0
    %1833 = vmatprep.subr.mxu0 0.0
    %1834 = vmatpush1.msra.mxu0 %v1744
    %1835 = vmatprep.subr.mxu0 0.0
    %1836 = vmatpush1.msra.mxu0 0.0
    %1837 = vmatprep.subr.mxu0 0.0
    %1838 = vmatpush1.msra.mxu0 0.0
    %1839 = vmatprep.subr.mxu0 0.0
    %1840 = vmatpush1.msra.mxu0 0.0
    %1841 = vmatprep.subr.mxu0 0.0
    %1842 = vmatpush1.msra.mxu0 0.0
    %1843 = vmatprep.subr.mxu0 0.0
    %1844 = vmatpush1.msra.mxu0 0.0
    %1845 = vmatprep.subr.mxu0 0.0
    %1846 = vmatpush1.msra.mxu0 0.0
    %1847 = vmatprep.subr.mxu0 0.0
    %1848 = vmatpush1.msra.mxu0 0.0
    %1849 = vmatprep.subr.mxu0 0.0
    %1850 = vmatpush1.msra.mxu0 0.0
    %1851 = vmatprep.subr.mxu0 0.0
    %1852 = vmatpush1.msra.mxu0 0.0
    %1853 = vmatprep.subr.mxu0 0.0
    %1854 = vmatpush1.msra.mxu0 0.0
    %1855 = vmatprep.subr.mxu0 0.0
    %1856 = vmatpush1.msra.mxu0 0.0
    %1857 = vmatprep.subr.mxu0 0.0
    %1858 = vmatpush1.msra.mxu0 0.0
    %1859 = vmatprep.subr.mxu0 0.0
    %1860 = vmatpush1.msra.mxu0 0.0
    %1861 = vmatprep.subr.mxu0 0.0
    %1862 = vmatpush1.msra.mxu0 0.0
    %1863 = vmatprep.subr.mxu0 0.0
    %1864 = vmatpush1.msra.mxu0 0.0
    %1865 = vmatprep.subr.mxu0 0.0
    %1866 = vmatpush1.msra.mxu0 0.0
    %1867 = vmatprep.subr.mxu0 0.0
    %1868 = vmatpush1.msra.mxu0 0.0
    %1869 = vmatprep.subr.mxu0 0.0
    %1870 = vmatpush1.msra.mxu0 0.0
    %1871 = vmatprep.subr.mxu0 0.0
    %1872 = vmatpush1.msra.mxu0 0.0
    %1873 = vmatprep.subr.mxu0 0.0
    %1874 = vmatpush1.msra.mxu0 0.0
    %1875 = vmatprep.subr.mxu0 0.0
    %1876 = vmatpush1.msra.mxu0 0.0
    %1877 = vmatprep.subr.mxu0 0.0
    %1878 = vmatpush1.msra.mxu0 0.0
    %1879 = vmatprep.subr.mxu0 0.0
    %1880 = vmatpush1.msra.mxu0 0.0
    %1881 = vmatprep.subr.mxu0 0.0
    %1882 = vmatpush1.msra.mxu0 0.0
    %1883 = vmatprep.subr.mxu0 0.0
    %1884 = vmatpush1.msra.mxu0 0.0
    %1885 = vmatprep.subr.mxu0 0.0
    %1886 = vmatpush1.msra.mxu0 0.0
    %1887 = vmatprep.subr.mxu0 0.0
    %1888 = vmatpush1.msra.mxu0 0.0
    %1889 = vmatprep.subr.mxu0 0.0
    %1890 = vmatpush1.msra.mxu0 0.0
    %1891 = vmatprep.subr.mxu0 0.0
    %1892 = vmatpush1.msra.mxu0 0.0
    %1893 = vmatprep.subr.mxu0 0.0
    %1894 = vmatpush1.msra.mxu0 0.0
    %1895 = vmatprep.subr.mxu0 0.0
    %1896 = vmatpush1.msra.mxu0 0.0
    %1897 = vmatprep.mubr.f32.mxu0 0.0
    %1898 = vmatmul.mubr.f32.gmra.mrb[0].mxu0 %v1828
    %v1899 = vpop.f32.mrb[0].mxu0
    %v1900 = vadd.f32 %v1819, %v1899
    %v1901 = vpop.f32.mrb[0].mxu0
    %1902 = vmatprep.mubr.f32.mxu0 0.0
    %1903 = vmatmul.mubr.f32.gmra.mrb[0].mxu0 %v1831
    %v1904 = vpop.f32.mrb[0].mxu0
    %v1905 = vadd.f32 %v1824, %v1904
    %v1906 = vpop.f32.mrb[0].mxu0
    %1907 = vdwg.mxu0
    %v1908 = vld [vmem:[#allocation4 + $0x130] sm:$0xff]
    %v1910 = vsel %vm256, %v1726, 0
    %v1913 = vsel %vm256, %v1731, 0
    %1915 = vmatprep.subr.mxu0 0.0
    %1916 = vmatpush1.msra.mxu0 %v1908
    %1917 = vmatprep.subr.mxu0 0.0
    %1918 = vmatpush1.msra.mxu0 0.0
    %1919 = vmatprep.subr.mxu0 0.0
    %1920 = vmatpush1.msra.mxu0 0.0
    %1921 = vmatprep.subr.mxu0 0.0
    %1922 = vmatpush1.msra.mxu0 0.0
    %1923 = vmatprep.subr.mxu0 0.0
    %1924 = vmatpush1.msra.mxu0 0.0
    %1925 = vmatprep.subr.mxu0 0.0
    %1926 = vmatpush1.msra.mxu0 0.0
    %1927 = vmatprep.subr.mxu0 0.0
    %1928 = vmatpush1.msra.mxu0 0.0
    %1929 = vmatprep.subr.mxu0 0.0
    %1930 = vmatpush1.msra.mxu0 0.0
    %1931 = vmatprep.subr.mxu0 0.0
    %1932 = vmatpush1.msra.mxu0 0.0
    %1933 = vmatprep.subr.mxu0 0.0
    %1934 = vmatpush1.msra.mxu0 0.0
    %1935 = vmatprep.subr.mxu0 0.0
    %1936 = vmatpush1.msra.mxu0 0.0
    %1937 = vmatprep.subr.mxu0 0.0
    %1938 = vmatpush1.msra.mxu0 0.0
    %1939 = vmatprep.subr.mxu0 0.0
    %1940 = vmatpush1.msra.mxu0 0.0
    %1941 = vmatprep.subr.mxu0 0.0
    %1942 = vmatpush1.msra.mxu0 0.0
    %1943 = vmatprep.subr.mxu0 0.0
    %1944 = vmatpush1.msra.mxu0 0.0
    %1945 = vmatprep.subr.mxu0 0.0
    %1946 = vmatpush1.msra.mxu0 0.0
    %1947 = vmatprep.subr.mxu0 0.0
    %1948 = vmatpush1.msra.mxu0 0.0
    %1949 = vmatprep.subr.mxu0 0.0
    %1950 = vmatpush1.msra.mxu0 0.0
    %1951 = vmatprep.subr.mxu0 0.0
    %1952 = vmatpush1.msra.mxu0 0.0
    %1953 = vmatprep.subr.mxu0 0.0
    %1954 = vmatpush1.msra.mxu0 0.0
    %1955 = vmatprep.subr.mxu0 0.0
    %1956 = vmatpush1.msra.mxu0 0.0
    %1957 = vmatprep.subr.mxu0 0.0
    %1958 = vmatpush1.msra.mxu0 0.0
    %1959 = vmatprep.subr.mxu0 0.0
    %1960 = vmatpush1.msra.mxu0 0.0
    %1961 = vmatprep.subr.mxu0 0.0
    %1962 = vmatpush1.msra.mxu0 0.0
    %1963 = vmatprep.subr.mxu0 0.0
    %1964 = vmatpush1.msra.mxu0 0.0
    %1965 = vmatprep.subr.mxu0 0.0
    %1966 = vmatpush1.msra.mxu0 0.0
    %1967 = vmatprep.subr.mxu0 0.0
    %1968 = vmatpush1.msra.mxu0 0.0
    %1969 = vmatprep.subr.mxu0 0.0
    %1970 = vmatpush1.msra.mxu0 0.0
    %1971 = vmatprep.subr.mxu0 0.0
    %1972 = vmatpush1.msra.mxu0 0.0
    %1973 = vmatprep.subr.mxu0 0.0
    %1974 = vmatpush1.msra.mxu0 0.0
    %1975 = vmatprep.subr.mxu0 0.0
    %1976 = vmatpush1.msra.mxu0 0.0
    %1977 = vmatprep.subr.mxu0 0.0
    %1978 = vmatpush1.msra.mxu0 0.0
    %1979 = vmatprep.mubr.f32.mxu0 0.0
    %1980 = vmatmul.mubr.f32.gmra.mrb[0].mxu0 %v1910
    %v1981 = vpop.f32.mrb[0].mxu0
    %v1982 = vadd.f32 0.0, %v1981
    %v1983 = vpop.f32.mrb[0].mxu0
    %1984 = vmatprep.mubr.f32.mxu0 0.0
    %1985 = vmatmul.mubr.f32.gmra.mrb[0].mxu0 %v1913
    %v1986 = vpop.f32.mrb[0].mxu0
    %v1987 = vadd.f32 0.0, %v1986
    %v1988 = vpop.f32.mrb[0].mxu0
    %1989 = vdwg.mxu0
    %v1990 = vadd.f32 %v1900, %v1982
    %v1991 = vadd.f32 %v1905, %v1987
    %v1992 = vld [vmem:[#allocation4 + $0x138] sm:$0xff]
    %v1994 = vsel %vm256, %v1736, 0
    %v1997 = vsel %vm256, %v1741, 0
    %1999 = vmatprep.subr.mxu0 0.0
    %2000 = vmatpush1.msra.mxu0 %v1992
    %2001 = vmatprep.subr.mxu0 0.0
    %2002 = vmatpush1.msra.mxu0 0.0
    %2003 = vmatprep.subr.mxu0 0.0
    %2004 = vmatpush1.msra.mxu0 0.0
    %2005 = vmatprep.subr.mxu0 0.0
    %2006 = vmatpush1.msra.mxu0 0.0
    %2007 = vmatprep.subr.mxu0 0.0
    %2008 = vmatpush1.msra.mxu0 0.0
    %2009 = vmatprep.subr.mxu0 0.0
    %2010 = vmatpush1.msra.mxu0 0.0
    %2011 = vmatprep.subr.mxu0 0.0
    %2012 = vmatpush1.msra.mxu0 0.0
    %2013 = vmatprep.subr.mxu0 0.0
    %2014 = vmatpush1.msra.mxu0 0.0
    %2015 = vmatprep.subr.mxu0 0.0
    %2016 = vmatpush1.msra.mxu0 0.0
    %2017 = vmatprep.subr.mxu0 0.0
    %2018 = vmatpush1.msra.mxu0 0.0
    %2019 = vmatprep.subr.mxu0 0.0
    %2020 = vmatpush1.msra.mxu0 0.0
    %2021 = vmatprep.subr.mxu0 0.0
    %2022 = vmatpush1.msra.mxu0 0.0
    %2023 = vmatprep.subr.mxu0 0.0
    %2024 = vmatpush1.msra.mxu0 0.0
    %2025 = vmatprep.subr.mxu0 0.0
    %2026 = vmatpush1.msra.mxu0 0.0
    %2027 = vmatprep.subr.mxu0 0.0
    %2028 = vmatpush1.msra.mxu0 0.0
    %2029 = vmatprep.subr.mxu0 0.0
    %2030 = vmatpush1.msra.mxu0 0.0
    %2031 = vmatprep.subr.mxu0 0.0
    %2032 = vmatpush1.msra.mxu0 0.0
    %2033 = vmatprep.subr.mxu0 0.0
    %2034 = vmatpush1.msra.mxu0 0.0
    %2035 = vmatprep.subr.mxu0 0.0
    %2036 = vmatpush1.msra.mxu0 0.0
    %2037 = vmatprep.subr.mxu0 0.0
    %2038 = vmatpush1.msra.mxu0 0.0
    %2039 = vmatprep.subr.mxu0 0.0
    %2040 = vmatpush1.msra.mxu0 0.0
    %2041 = vmatprep.subr.mxu0 0.0
    %2042 = vmatpush1.msra.mxu0 0.0
    %2043 = vmatprep.subr.mxu0 0.0
    %2044 = vmatpush1.msra.mxu0 0.0
    %2045 = vmatprep.subr.mxu0 0.0
    %2046 = vmatpush1.msra.mxu0 0.0
    %2047 = vmatprep.subr.mxu0 0.0
    %2048 = vmatpush1.msra.mxu0 0.0
    %2049 = vmatprep.subr.mxu0 0.0
    %2050 = vmatpush1.msra.mxu0 0.0
    %2051 = vmatprep.subr.mxu0 0.0
    %2052 = vmatpush1.msra.mxu0 0.0
    %2053 = vmatprep.subr.mxu0 0.0
    %2054 = vmatpush1.msra.mxu0 0.0
    %2055 = vmatprep.subr.mxu0 0.0
    %2056 = vmatpush1.msra.mxu0 0.0
    %2057 = vmatprep.subr.mxu0 0.0
    %2058 = vmatpush1.msra.mxu0 0.0
    %2059 = vmatprep.subr.mxu0 0.0
    %2060 = vmatpush1.msra.mxu0 0.0
    %2061 = vmatprep.subr.mxu0 0.0
    %2062 = vmatpush1.msra.mxu0 0.0
    %2063 = vmatprep.mubr.f32.mxu0 0.0
    %2064 = vmatmul.mubr.f32.gmra.mrb[0].mxu0 %v1994
    %v2065 = vpop.f32.mrb[0].mxu0
    %v2066 = vadd.f32 0.0, %v2065
    %v2067 = vpop.f32.mrb[0].mxu0
    %2068 = vmatprep.mubr.f32.mxu0 0.0
    %2069 = vmatmul.mubr.f32.gmra.mrb[0].mxu0 %v1997
    %v2070 = vpop.f32.mrb[0].mxu0
    %v2071 = vadd.f32 0.0, %v2070
    %v2072 = vpop.f32.mrb[0].mxu0
    %2073 = vdwg.mxu0
    %v2074 = vadd.f32 %v1990, %v2066
    %v2075 = vadd.f32 %v1991, %v2071
    %v2076 = vld [vmem:[#allocation4 + $0x1a9] sm:$0x1]
    %v2077 = vlaneseq
    %v2078 = vshrl.u32 %v2077, 7
    %v2079 = vsub.s32 0, %v2078
    %v2080 = vrot.slane %v2076, %v2079
    %v2081 = vadd.f32 %v2074, %v2080
    %v2082 = vadd.f32 %v2075, %v2080
    %v2083 = vadd.f32 %v1244, %v2081
    %v2084 = vadd.f32 %v1245, %v2082
    %v2085 = vld [vmem:[#allocation4 + $0x1aa] sm:$0x1]
    %v2086 = vld [vmem:[#allocation4 + $0x1ab] sm:$0x1]
    %v2087 = vsel %vm144, %v2083, 0.0
    %2088 = vadd.xlane.f32.xlu0 %v2087
    %v2089 = vpop.xlane.xlu0 %2088
    %v2090 = vsel %vm144, %v2084, 0.0
    %2091 = vadd.xlane.f32.xlu0 %v2090
    %v2092 = vpop.xlane.xlu0 %2091
    %v2093 = vmul.f32 %v2089, %v985
    %v2094 = vmul.f32 %v2092, %v985
    %v2095 = vsub.f32 %v2083, %v2093
    %v2096 = vsub.f32 %v2084, %v2094
    %v2097 = vmul.f32 %v2095, %v2095
    %v2098 = vmul.f32 %v2096, %v2096
    %v2099 = vsel %vm144, %v2097, 0.0
    %2100 = vadd.xlane.f32.xlu0 %v2099
    %v2101 = vpop.xlane.xlu0 %2100
    %v2102 = vsel %vm144, %v2098, 0.0
    %2103 = vadd.xlane.f32.xlu0 %v2102
    %v2104 = vpop.xlane.xlu0 %2103
    %v2105 = vmul.f32 %v2101, %v985
    %v2106 = vmul.f32 %v2104, %v985
    %v2107 = vadd.f32 %v2105, 1e-05
    %v2108 = vadd.f32 %v2106, 1e-05
    %v2109 = vrsqrt.pop %v2107
    %v2110 = vrsqrt.pop %v2108
    %v2111 = vmul.f32 %v2095, %v2109
    %v2112 = vmul.f32 %v2096, %v2110
    %v2113 = vlaneseq
    %v2114 = vshrl.u32 %v2113, 7
    %v2115 = vsub.s32 0, %v2114
    %v2116 = vrot.slane %v2085, %v2115
    %v2117 = vmul.f32 %v2111, %v2116
    %v2118 = vmul.f32 %v2112, %v2116
    %v2119 = vlaneseq
    %v2120 = vshrl.u32 %v2119, 7
    %v2121 = vsub.s32 0, %v2120
    %v2122 = vrot.slane %v2086, %v2121
    %v2123 = vadd.f32 %v2117, %v2122
    %v2124 = vadd.f32 %v2118, %v2122
    %v2125 = vld [vmem:[#allocation4 + $0x140] sm:$0xff]
    %v2126 = vld [vmem:[#allocation4 + $0x148] sm:$0xff]
    %v2127 = vld [vmem:[#allocation4 + $0x150] sm:$0xff]
    %v2128 = vld [vmem:[#allocation4 + $0x158] sm:$0xff]
    %v2129 = vld [vmem:[#allocation4 + $0x1ac] sm:$0x1]
    %v2130 = vlaneseq
    %v2131 = vshrl.u32 %v2130, 7
    %v2132 = vsub.s32 0, %v2131
    %v2133 = vrot.slane %v2129, %v2132
    %v2135 = vsel %vm144, %v2123, 0
    %v2138 = vsel %vm144, %v2124, 0
    %2140 = vmatprep.subr.mxu0 0.0
    %2141 = vmatpush1.msra.mxu0 %v2125
    %2142 = vmatprep.subr.mxu0 0.0
    %2143 = vmatpush1.msra.mxu0 %v2126
    %2144 = vmatprep.subr.mxu0 0.0
    %2145 = vmatpush1.msra.mxu0 %v2127
    %2146 = vmatprep.subr.mxu0 0.0
    %2147 = vmatpush1.msra.mxu0 %v2128
    %2148 = vmatprep.subr.mxu0 0.0
    %2149 = vmatpush1.msra.mxu0 0.0
    %2150 = vmatprep.subr.mxu0 0.0
    %2151 = vmatpush1.msra.mxu0 0.0
    %2152 = vmatprep.subr.mxu0 0.0
    %2153 = vmatpush1.msra.mxu0 0.0
    %2154 = vmatprep.subr.mxu0 0.0
    %2155 = vmatpush1.msra.mxu0 0.0
    %2156 = vmatprep.subr.mxu0 0.0
    %2157 = vmatpush1.msra.mxu0 0.0
    %2158 = vmatprep.subr.mxu0 0.0
    %2159 = vmatpush1.msra.mxu0 0.0
    %2160 = vmatprep.subr.mxu0 0.0
    %2161 = vmatpush1.msra.mxu0 0.0
    %2162 = vmatprep.subr.mxu0 0.0
    %2163 = vmatpush1.msra.mxu0 0.0
    %2164 = vmatprep.subr.mxu0 0.0
    %2165 = vmatpush1.msra.mxu0 0.0
    %2166 = vmatprep.subr.mxu0 0.0
    %2167 = vmatpush1.msra.mxu0 0.0
    %2168 = vmatprep.subr.mxu0 0.0
    %2169 = vmatpush1.msra.mxu0 0.0
    %2170 = vmatprep.subr.mxu0 0.0
    %2171 = vmatpush1.msra.mxu0 0.0
    %2172 = vmatprep.subr.mxu0 0.0
    %2173 = vmatpush1.msra.mxu0 0.0
    %2174 = vmatprep.subr.mxu0 0.0
    %2175 = vmatpush1.msra.mxu0 0.0
    %2176 = vmatprep.subr.mxu0 0.0
    %2177 = vmatpush1.msra.mxu0 0.0
    %2178 = vmatprep.subr.mxu0 0.0
    %2179 = vmatpush1.msra.mxu0 0.0
    %2180 = vmatprep.subr.mxu0 0.0
    %2181 = vmatpush1.msra.mxu0 0.0
    %2182 = vmatprep.subr.mxu0 0.0
    %2183 = vmatpush1.msra.mxu0 0.0
    %2184 = vmatprep.subr.mxu0 0.0
    %2185 = vmatpush1.msra.mxu0 0.0
    %2186 = vmatprep.subr.mxu0 0.0
    %2187 = vmatpush1.msra.mxu0 0.0
    %2188 = vmatprep.subr.mxu0 0.0
    %2189 = vmatpush1.msra.mxu0 0.0
    %2190 = vmatprep.subr.mxu0 0.0
    %2191 = vmatpush1.msra.mxu0 0.0
    %2192 = vmatprep.subr.mxu0 0.0
    %2193 = vmatpush1.msra.mxu0 0.0
    %2194 = vmatprep.subr.mxu0 0.0
    %2195 = vmatpush1.msra.mxu0 0.0
    %2196 = vmatprep.subr.mxu0 0.0
    %2197 = vmatpush1.msra.mxu0 0.0
    %2198 = vmatprep.subr.mxu0 0.0
    %2199 = vmatpush1.msra.mxu0 0.0
    %2200 = vmatprep.subr.mxu0 0.0
    %2201 = vmatpush1.msra.mxu0 0.0
    %2202 = vmatprep.subr.mxu0 0.0
    %2203 = vmatpush1.msra.mxu0 0.0
    %2204 = vmatprep.mubr.f32.mxu0 0.0
    %2205 = vmatmul.mubr.f32.gmra.mrb[0].mxu0 %v2135
    %v2206 = vpop.f32.mrb[0].mxu0
    %v2207 = vadd.f32 %v2133, %v2206
    %v2208 = vpop.f32.mrb[0].mxu0
    %2209 = vmatprep.mubr.f32.mxu0 0.0
    %2210 = vmatmul.mubr.f32.gmra.mrb[0].mxu0 %v2138
    %v2211 = vpop.f32.mrb[0].mxu0
    %v2212 = vadd.f32 %v2133, %v2211
    %v2213 = vpop.f32.mrb[0].mxu0
    %2214 = vdwg.mxu0
    %v2215 = vmax.f32 %v2207, 0.0
    %v2216 = vmax.f32 %v2212, 0.0
    %v2217 = vld [vmem:[#allocation4 + $0x160] sm:$0xff]
    %v2218 = vld [vmem:[#allocation4 + $0x168] sm:$0xff]
    %v2219 = vld [vmem:[#allocation4 + $0x170] sm:$0xff]
    %v2220 = vld [vmem:[#allocation4 + $0x178] sm:$0xff]
    %v2221 = vld [vmem:[#allocation4 + $0x180] sm:$0xff]
    %v2222 = vld [vmem:[#allocation4 + $0x188] sm:$0xff]
    %v2223 = vld [vmem:[#allocation4 + $0x190] sm:$0xff]
    %v2224 = vld [vmem:[#allocation4 + $0x198] sm:$0xff]
    %v2225 = vld [vmem:[#allocation4 + $0x1ad] sm:$0x1]
    %v2226 = vlaneseq
    %v2227 = vshrl.u32 %v2226, 7
    %v2228 = vsub.s32 0, %v2227
    %v2229 = vrot.slane %v2225, %v2228
    %v2231 = vsel %vm394, %v2215, 0
    %v2234 = vsel %vm394, %v2216, 0
    %2236 = vmatprep.subr.mxu0 0.0
    %2237 = vmatpush1.msra.mxu0 %v2217
    %2238 = vmatprep.subr.mxu0 0.0
    %2239 = vmatpush1.msra.mxu0 %v2218
    %2240 = vmatprep.subr.mxu0 0.0
    %2241 = vmatpush1.msra.mxu0 %v2219
    %2242 = vmatprep.subr.mxu0 0.0
    %2243 = vmatpush1.msra.mxu0 %v2220
    %2244 = vmatprep.subr.mxu0 0.0
    %2245 = vmatpush1.msra.mxu0 %v2221
    %2246 = vmatprep.subr.mxu0 0.0
    %2247 = vmatpush1.msra.mxu0 %v2222
    %2248 = vmatprep.subr.mxu0 0.0
    %2249 = vmatpush1.msra.mxu0 %v2223
    %2250 = vmatprep.subr.mxu0 0.0
    %2251 = vmatpush1.msra.mxu0 %v2224
    %2252 = vmatprep.subr.mxu0 0.0
    %2253 = vmatpush1.msra.mxu0 0.0
    %2254 = vmatprep.subr.mxu0 0.0
    %2255 = vmatpush1.msra.mxu0 0.0
    %2256 = vmatprep.subr.mxu0 0.0
    %2257 = vmatpush1.msra.mxu0 0.0
    %2258 = vmatprep.subr.mxu0 0.0
    %2259 = vmatpush1.msra.mxu0 0.0
    %2260 = vmatprep.subr.mxu0 0.0
    %2261 = vmatpush1.msra.mxu0 0.0
    %2262 = vmatprep.subr.mxu0 0.0
    %2263 = vmatpush1.msra.mxu0 0.0
    %2264 = vmatprep.subr.mxu0 0.0
    %2265 = vmatpush1.msra.mxu0 0.0
    %2266 = vmatprep.subr.mxu0 0.0
    %2267 = vmatpush1.msra.mxu0 0.0
    %2268 = vmatprep.subr.mxu0 0.0
    %2269 = vmatpush1.msra.mxu0 0.0
    %2270 = vmatprep.subr.mxu0 0.0
    %2271 = vmatpush1.msra.mxu0 0.0
    %2272 = vmatprep.subr.mxu0 0.0
    %2273 = vmatpush1.msra.mxu0 0.0
    %2274 = vmatprep.subr.mxu0 0.0
    %2275 = vmatpush1.msra.mxu0 0.0
    %2276 = vmatprep.subr.mxu0 0.0
    %2277 = vmatpush1.msra.mxu0 0.0
    %2278 = vmatprep.subr.mxu0 0.0
    %2279 = vmatpush1.msra.mxu0 0.0
    %2280 = vmatprep.subr.mxu0 0.0
    %2281 = vmatpush1.msra.mxu0 0.0
    %2282 = vmatprep.subr.mxu0 0.0
    %2283 = vmatpush1.msra.mxu0 0.0
    %2284 = vmatprep.subr.mxu0 0.0
    %2285 = vmatpush1.msra.mxu0 0.0
    %2286 = vmatprep.subr.mxu0 0.0
    %2287 = vmatpush1.msra.mxu0 0.0
    %2288 = vmatprep.subr.mxu0 0.0
    %2289 = vmatpush1.msra.mxu0 0.0
    %2290 = vmatprep.subr.mxu0 0.0
    %2291 = vmatpush1.msra.mxu0 0.0
    %2292 = vmatprep.subr.mxu0 0.0
    %2293 = vmatpush1.msra.mxu0 0.0
    %2294 = vmatprep.subr.mxu0 0.0
    %2295 = vmatpush1.msra.mxu0 0.0
    %2296 = vmatprep.subr.mxu0 0.0
    %2297 = vmatpush1.msra.mxu0 0.0
    %2298 = vmatprep.subr.mxu0 0.0
    %2299 = vmatpush1.msra.mxu0 0.0
    %2300 = vmatprep.mubr.f32.mxu0 0.0
    %2301 = vmatmul.mubr.f32.gmra.mrb[0].mxu0 %v2231
    %v2302 = vpop.f32.mrb[0].mxu0
    %v2303 = vadd.f32 %v2229, %v2302
    %v2304 = vpop.f32.mrb[0].mxu0
    %2305 = vmatprep.mubr.f32.mxu0 0.0
    %2306 = vmatmul.mubr.f32.gmra.mrb[0].mxu0 %v2234
    %v2307 = vpop.f32.mrb[0].mxu0
    %v2308 = vadd.f32 %v2229, %v2307
    %v2309 = vpop.f32.mrb[0].mxu0
    %2310 = vdwg.mxu0
    %v2311 = vadd.f32 %v2123, %v2303
    %v2312 = vadd.f32 %v2124, %v2308
    %v2313 = vld [vmem:[#allocation4 + $0x1ae] sm:$0x1]
    %v2314 = vld [vmem:[#allocation4 + $0x1af] sm:$0x1]
    %v2315 = vsel %vm144, %v2311, 0.0
    %2316 = vadd.xlane.f32.xlu0 %v2315
    %v2317 = vpop.xlane.xlu0 %2316
    %v2318 = vsel %vm144, %v2312, 0.0
    %2319 = vadd.xlane.f32.xlu0 %v2318
    %v2320 = vpop.xlane.xlu0 %2319
    %v2321 = vmul.f32 %v2317, %v985
    %v2322 = vmul.f32 %v2320, %v985
    %v2323 = vsub.f32 %v2311, %v2321
    %v2324 = vsub.f32 %v2312, %v2322
    %v2325 = vmul.f32 %v2323, %v2323
    %v2326 = vmul.f32 %v2324, %v2324
    %v2327 = vsel %vm144, %v2325, 0.0
    %2328 = vadd.xlane.f32.xlu0 %v2327
    %v2329 = vpop.xlane.xlu0 %2328
    %v2330 = vsel %vm144, %v2326, 0.0
    %2331 = vadd.xlane.f32.xlu0 %v2330
    %v2332 = vpop.xlane.xlu0 %2331
    %v2333 = vmul.f32 %v2329, %v985
    %v2334 = vmul.f32 %v2332, %v985
    %v2335 = vadd.f32 %v2333, 1e-05
    %v2336 = vadd.f32 %v2334, 1e-05
    %v2337 = vrsqrt.pop %v2335
    %v2338 = vrsqrt.pop %v2336
    %v2339 = vmul.f32 %v2323, %v2337
    %v2340 = vmul.f32 %v2324, %v2338
    %v2341 = vlaneseq
    %v2342 = vshrl.u32 %v2341, 7
    %v2343 = vsub.s32 0, %v2342
    %v2344 = vrot.slane %v2313, %v2343
    %v2345 = vmul.f32 %v2339, %v2344
    %v2346 = vmul.f32 %v2340, %v2344
    %v2347 = vlaneseq
    %v2348 = vshrl.u32 %v2347, 7
    %v2349 = vsub.s32 0, %v2348
    %v2350 = vrot.slane %v2314, %v2349
    %v2351 = vadd.f32 %v2345, %v2350
    %v2352 = vadd.f32 %v2346, %v2350
    %v2353 = vsel %vm144, %v2351, 0.0
    %v2354 = vrot.slane %v2353, 4
    %v2355 = vadd.f32 %v2353, %v2354
    %v2356 = vrot.slane %v2355, 2
    %v2357 = vadd.f32 %v2355, %v2356
    %v2358 = vrot.slane %v2357, 1
    %v2359 = vadd.f32 %v2357, %v2358
    %v2360 = vrcp.pop 8.0
    %v2361 = vmul.f32 %v2359, %v2360
    %v2362 = vsel %vm144, %v2352, 0.0
    %v2363 = vrot.slane %v2362, 4
    %v2364 = vadd.f32 %v2362, %v2363
    %v2365 = vrot.slane %v2364, 2
    %v2366 = vadd.f32 %v2364, %v2365
    %v2367 = vrot.slane %v2366, 1
    %v2368 = vadd.f32 %v2366, %v2367
    %v2369 = vmul.f32 %v2368, %v2360
    %vm2370 = vcmask 1040384
    %v2371 = vsel %vm2370, %v2361, %v2369
    %v2372 = vld [vmem:[#allocation4 + $0x1b0] sm:$0x1]
    %v2373 = vlaneseq
    %v2374 = vshrl.u32 %v2373, 7
    %v2375 = vsub.s32 0, %v2374
    %v2376 = vrot.slane %v2372, %v2375
    %v2377 = vmul.f32 %v2371, %v2376
    %vm2378 = vcmask 254976
    %v2379 = vsel %vm2378, %v2377, 0.0
    %2380 = vadd.xlane.f32.xlu0 %v2379
    %v2381 = vpop.xlane.xlu0 %2380
    %v2382 = vld [vmem:[#allocation4 + $0x1b1] sm:$0x1]
    %v2383 = vlaneseq
    %v2384 = vshrl.u32 %v2383, 7
    %v2385 = vsub.s32 0, %v2384
    %v2386 = vrot.slane %v2382, %v2385
    %v2387 = vadd.f32 %v2381, %v2386
    %vm2388 = vcmask 1024
    %2389 = vst.msk [vmem:[%s2] sm:$0x3] %vm2388, %v2387
    // Predicated region
    $region18: #{transformer_forward.1} parent=1 // pred_check
      _
    $region19: #{transformer_forward.1} parent=1 // pred_check_branch
      %2391 = sbr.rel (0) target = $region21
    $region20: #{transformer_forward.1} parent=1 // pred_region
      _
    $region21: #{transformer_forward.1} parent=1 // pred_fallthru
      _
    // Predicated region
    $region22: #{transformer_forward.1} parent=1 // pred_check
      _
    $region23: #{transformer_forward.1} parent=1 // pred_check_branch
      %2393 = sbr.rel (0) target = $region25
    $region24: #{transformer_forward.1} parent=1 // pred_region
      _
    $region25: #{transformer_forward.1} parent=1 // pred_fallthru
      _
    %2394 = vsyncpa [#allocation3], 1
    %2395 = vsyncpa [#allocation5], 1

</llo_original>
